<compile_context>
chip_gen: v5e
topology: v5e:2x2
jax: 0.10.0
libtpu: 0.0.40
codegen_flags: <defaults>
</compile_context>

<pallas_src>
import functools

import jax
import jax.numpy as jnp
from jax.experimental import pallas as pl
from jax.experimental.pallas import tpu as pltpu


def _round_up(x, m):
    return (x + m - 1) // m * m


# ----------------------------------------------------------------------------
# Kernel
# ----------------------------------------------------------------------------
def _mdn_kernel(x_ref,
                w1_ref, b1_ref,
                w2_ref, b2_ref,
                wh_ref, bh_ref,
                out_ref,
                *, K, KD):
    compute_dtype = w1_ref.dtype  # bf16 MXU operands, f32 accumulation

    # ----- hidden MLP: Linear -> Tanh -> Linear -> Tanh (lane-dense HPAD) ---
    x = x_ref[...].astype(compute_dtype)

    h1 = jnp.dot(x, w1_ref[...], preferred_element_type=jnp.float32) + b1_ref[...]
    h1 = jnp.tanh(h1)

    h2 = jnp.dot(h1.astype(compute_dtype), w2_ref[...],
                 preferred_element_type=jnp.float32) + b2_ref[...]
    h2 = jnp.tanh(h2)

    # ----- fused heads: one lane-dense matmul over [HPAD, NPAD] -------------
    # Column layout: [0, K) -> alpha logits, [K, K+KD) -> log-sigma,
    # [K+KD, K+2KD) -> mu, remaining lanes zero padding.
    zh = jnp.dot(h2.astype(compute_dtype), wh_ref[...],
                 preferred_element_type=jnp.float32) + bh_ref[...]

    col = jax.lax.broadcasted_iota(jnp.int32, zh.shape, 1)
    is_alpha = col < K
    is_sigma = jnp.logical_and(col >= K, col < K + KD)

    # Single exp over the tile: alpha cols -> exp(zh - max), sigma cols ->
    # exp(zh), everything else -> exp(0) (discarded).  Avoids a second full
    # exp pass and never produces inf on the mu / padding columns.
    za_max = jnp.max(jnp.where(is_alpha, zh, -jnp.inf), axis=-1, keepdims=True)
    e = jnp.exp(jnp.where(is_alpha, zh - za_max,
                          jnp.where(is_sigma, zh, 0.0)))
    denom = jnp.sum(jnp.where(is_alpha, e, 0.0), axis=-1, keepdims=True)
    alpha = e * pl.reciprocal(denom, approx=False)   # exact: rows sum to 1

    # alpha cols -> softmax, sigma cols -> exp, mu cols -> identity, pad -> 0.
    out = jnp.where(is_alpha, alpha, jnp.where(is_sigma, e, zh))
    out_ref[...] = out.astype(out_ref.dtype)


# ----------------------------------------------------------------------------
# One-time parameter preparation (hoisted out of the forward pass)
# ----------------------------------------------------------------------------
def prepare_mdn_params(params, num_mixtures, output_dim,
                       *, compute_dtype=jnp.bfloat16):
    """Fuse heads, zero-pad to lane-dense shapes, cast weights to bf16."""
    input_dim, H = params["w1"].shape
    K, D = num_mixtures, output_dim
    KD = K * D
    NH = K + 2 * KD
    NPAD = _round_up(NH, 128)
    HPAD = _round_up(H, 128)

    # Fused, zero-padded head projection [HPAD, NPAD].
    wh = jnp.concatenate([params["wa"], params["ws"], params["wm"]], axis=1)
    bh = jnp.concatenate([params["ba"], params["bs"], params["bm"]], axis=1)
    wh = jnp.pad(wh, ((0, HPAD - H), (0, NPAD - NH)))
    bh = jnp.pad(bh, ((0, 0), (0, NPAD - NH)))

    # Lane-dense hidden stack.  tanh(0)=0 and zero head rows keep the
    # padded hidden lanes inert.
    w1 = jnp.pad(params["w1"], ((0, 0), (0, HPAD - H)))
    b1 = jnp.pad(params["b1"], ((0, 0), (0, HPAD - H)))
    w2 = jnp.pad(params["w2"], ((0, HPAD - H), (0, HPAD - H)))
    b2 = jnp.pad(params["b2"], ((0, 0), (0, HPAD - H)))

    prepared = dict(
        w1=w1.astype(compute_dtype), b1=b1.astype(jnp.float32),
        w2=w2.astype(compute_dtype), b2=b2.astype(jnp.float32),
        wh=wh.astype(compute_dtype), bh=bh.astype(jnp.float32),
    )
    meta = dict(input_dim=input_dim, H=H, HPAD=HPAD, K=K, D=D,
                KD=KD, NH=NH, NPAD=NPAD,
                compute_itemsize=jnp.dtype(compute_dtype).itemsize)
    return prepared, meta


# ----------------------------------------------------------------------------
# Forward pass
# ----------------------------------------------------------------------------
def mdn_forward(x, prepared, meta, *, batch_tile=None):
    """MDN forward pass with a single Pallas TPU kernel.

    x: [B, input_dim] float32
    prepared/meta: from prepare_mdn_params (call once, reuse across steps).
    Returns (alpha [B, K], sigma [B, K, D], mu [B, K, D]).
    """
    B, input_dim = x.shape
    assert input_dim == meta["input_dim"]
    K, D, KD = meta["K"], meta["D"], meta["KD"]
    HPAD, NPAD = meta["HPAD"], meta["NPAD"]
    w_itemsize = meta["compute_itemsize"]

    # Batch tiling: at least 2 grid steps when possible (v7x has 2 TCs and the
    # axis is "parallel"), MXU/vreg-friendly multiples of 8, capped at 256
    # rows so a tile comfortably fits the v7x 64 MiB VMEM.
    B8 = _round_up(B, 8)
    if batch_tile is None:
        if B8 <= 8:
            batch_tile = 8
        else:
            batch_tile = min(_round_up(pl.cdiv(B8, 2), 8), 256)
    batch_tile = _round_up(batch_tile, 8)
    B_pad = _round_up(B, batch_tile)
    x_p = x if B_pad == B else jnp.pad(x, ((0, B_pad - B), (0, 0)))

    grid = (B_pad // batch_tile,)

    # VMEM budget (double-buffered x/out tiles, weights counted twice to stay
    # valid even if the single-buffer fallback path is taken, plus epilogue
    # temporaries), clamped to [32 MiB, 56 MiB].
    weight_bytes = ((input_dim * HPAD + HPAD * HPAD + HPAD * NPAD) * w_itemsize
                    + (2 * HPAD + NPAD) * 4)
    io_bytes = 2 * batch_tile * (NPAD * 4 + input_dim * 4)
    tmp_bytes = batch_tile * (2 * HPAD * 4 + 4 * NPAD * 4)
    vmem_limit = int(1.5 * (2 * weight_bytes + io_bytes + tmp_bytes))
    vmem_limit = min(max(vmem_limit, 32 * 1024 * 1024), 56 * 1024 * 1024)

    cost = pl.CostEstimate(
        flops=2 * B_pad * (input_dim * HPAD + HPAD * HPAD + HPAD * NPAD),
        transcendentals=B_pad * (2 * HPAD + NPAD),
        bytes_accessed=(B_pad * input_dim * 4 + weight_bytes + B_pad * NPAD * 4),
    )

    kernel = functools.partial(_mdn_kernel, K=K, KD=KD)

    def run(single_buffer_weights):
        def weight_spec(shape):
            kw = {}
            if single_buffer_weights:
                # Constant index_map -> never re-fetched; one buffer suffices.
                kw["pipeline_mode"] = pl.Buffered(1)
            return pl.BlockSpec(shape, lambda i: (0,) * len(shape), **kw)

        return pl.pallas_call(
            kernel,
            out_shape=jax.ShapeDtypeStruct((B_pad, NPAD), jnp.float32),
            grid_spec=pltpu.PrefetchScalarGridSpec(
                num_scalar_prefetch=0,
                grid=grid,
                in_specs=[
                    pl.BlockSpec((batch_tile, input_dim), lambda i: (i, 0)),  # x
                    weight_spec((input_dim, HPAD)), weight_spec((1, HPAD)),   # hidden 1
                    weight_spec((HPAD, HPAD)),      weight_spec((1, HPAD)),   # hidden 2
                    weight_spec((HPAD, NPAD)),      weight_spec((1, NPAD)),   # fused heads
                ],
                out_specs=pl.BlockSpec((batch_tile, NPAD), lambda i: (i, 0)),
            ),
            compiler_params=pltpu.CompilerParams(
                dimension_semantics=("parallel",),
                vmem_limit_bytes=vmem_limit),
            cost_estimate=cost,
        )(x_p,
          prepared["w1"], prepared["b1"],
          prepared["w2"], prepared["b2"],
          prepared["wh"], prepared["bh"])

    try:
        out_slab = run(single_buffer_weights=True)
    except Exception:
        # Older JAX may reject buffer_count=1; fall back to default buffering.
        out_slab = run(single_buffer_weights=False)

    # Glue: slice the lane-dense slab back into alpha / sigma / mu.
    alpha = out_slab[:B, :K]
    sigma = out_slab[:B, K:K + KD].reshape(B, K, D)
    mu = out_slab[:B, K + KD:K + 2 * KD].reshape(B, K, D)
    return alpha, sigma, mu


# ----------------------------------------------------------------------------
# Parameter init + pure-JAX reference
# ----------------------------------------------------------------------------
def init_mdn_params(key, input_dim, output_dim, num_hidden, num_mixtures):
    """Deterministic parameter init (weights [in, out], biases [1, out])."""
    H, K, D = num_hidden, num_mixtures, output_dim
    keys = jax.random.split(key, 10)

    def lin(kw, kb, fan_in, fan_out):
        bound = 1.0 / jnp.sqrt(fan_in)
        w = jax.random.uniform(kw, (fan_in, fan_out), jnp.float32, -bound, bound)
        b = jax.random.uniform(kb, (1, fan_out), jnp.float32, -bound, bound)
        return w, b

    w1, b1 = lin(keys[0], keys[1], input_dim, H)
    w2, b2 = lin(keys[2], keys[3], H, H)
    wa, ba = lin(keys[4], keys[5], H, K)
    ws, bs = lin(keys[6], keys[7], H, K * D)
    wm, bm = lin(keys[8], keys[9], H, K * D)
    return dict(w1=w1, b1=b1, w2=w2, b2=b2,
                wa=wa, ba=ba, ws=ws, bs=bs, wm=wm, bm=bm)


def mdn_reference(x, params, num_mixtures, output_dim):
    """Pure-JAX f32 reference matching the PyTorch forward."""
    h = jnp.tanh(x @ params["w1"] + params["b1"])
    h = jnp.tanh(h @ params["w2"] + params["b2"])
    alpha = jax.nn.softmax(h @ params["wa"] + params["ba"], axis=-1)
    sigma = jnp.exp(h @ params["ws"] + params["bs"]).reshape(
        -1, num_mixtures, output_dim)
    mu = (h @ params["wm"] + params["bm"]).reshape(-1, num_mixtures, output_dim)
    return alpha, sigma, mu


if __name__ == "__main__":
    # Small, MDN-consistent shapes.
    B = 16           # batch
    input_dim = 4
    output_dim = 2
    num_hidden = 32
    num_mixtures = 4

    key = jax.random.PRNGKey(0)
    kx, kp = jax.random.split(key)
    x = jax.random.normal(kx, (B, input_dim), dtype=jnp.float32)
    params = init_mdn_params(kp, input_dim, output_dim, num_hidden, num_mixtures)

    # One-time parameter preparation (head fusion, padding, bf16 cast).
    prepared, meta = prepare_mdn_params(params, num_mixtures, output_dim)

    alpha, sigma, mu = mdn_forward(x, prepared, meta)
    jax.block_until_ready((alpha, sigma, mu))

    # Sanity check against the pure-JAX f32 reference (kernel uses bf16 MXU
    # operands with f32 accumulation -> slightly looser tolerances).
    a_ref, s_ref, m_ref = mdn_reference(x, params, num_mixtures, output_dim)
    assert alpha.shape == (B, num_mixtures)
    assert sigma.shape == (B, num_mixtures, output_dim)
    assert mu.shape == (B, num_mixtures, output_dim)
    assert jnp.allclose(alpha, a_ref, atol=2e-2, rtol=2e-2)
    assert jnp.allclose(sigma, s_ref, atol=2e-2, rtol=2e-2)
    assert jnp.allclose(mu, m_ref, atol=2e-2, rtol=2e-2)
    # alpha is a proper distribution (exact reciprocal in the kernel).
    assert jnp.allclose(jnp.sum(alpha, axis=-1), 1.0, atol=1e-3)

    print("KERNEL_OK")
</pallas_src>

<mosaic_0001>
module attributes {stable_mosaic.version = 11 : i64} {
  func.func @_mdn_kernel(%arg0: i32, %arg1: memref<8x4xf32, #tpu.memory_space<vmem>>, %arg2: memref<4x128xbf16, #tpu.memory_space<vmem>>, %arg3: memref<1x128xf32, #tpu.memory_space<vmem>>, %arg4: memref<128x128xbf16, #tpu.memory_space<vmem>>, %arg5: memref<1x128xf32, #tpu.memory_space<vmem>>, %arg6: memref<128x128xbf16, #tpu.memory_space<vmem>>, %arg7: memref<1x128xf32, #tpu.memory_space<vmem>>, %arg8: memref<8x128xf32, #tpu.memory_space<vmem>>) attributes {dimension_semantics = [#tpu.dimension_semantics<parallel>], iteration_bounds = array<i64: 2>, scalar_prefetch = 0 : i64, scratch_operands = 0 : i64, tpu.core_type = #tpu.core_type<tc>, window_params = [{transform_indices = @transform_0, window_bounds = array<i64: 8, 4>}, {pipeline_mode = #tpu.pipeline_mode<synchronous>, transform_indices = @transform_1, window_bounds = array<i64: 4, 128>}, {pipeline_mode = #tpu.pipeline_mode<synchronous>, transform_indices = @transform_2, window_bounds = array<i64: 1, 128>}, {pipeline_mode = #tpu.pipeline_mode<synchronous>, transform_indices = @transform_3, window_bounds = array<i64: 128, 128>}, {pipeline_mode = #tpu.pipeline_mode<synchronous>, transform_indices = @transform_4, window_bounds = array<i64: 1, 128>}, {pipeline_mode = #tpu.pipeline_mode<synchronous>, transform_indices = @transform_5, window_bounds = array<i64: 128, 128>}, {pipeline_mode = #tpu.pipeline_mode<synchronous>, transform_indices = @transform_6, window_bounds = array<i64: 1, 128>}, {transform_indices = @transform_7, window_bounds = array<i64: 8, 128>}]} {
    %c0 = arith.constant 0 : index
    %c0_0 = arith.constant 0 : index
    %0 = vector.load %arg1[%c0, %c0_0] : memref<8x4xf32, #tpu.memory_space<vmem>>, vector<8x4xf32>
    %1 = arith.truncf %0 : vector<8x4xf32> to vector<8x4xbf16>
    %c0_1 = arith.constant 0 : index
    %c0_2 = arith.constant 0 : index
    %2 = vector.load %arg2[%c0_1, %c0_2] : memref<4x128xbf16, #tpu.memory_space<vmem>>, vector<4x128xbf16>
    %cst = arith.constant dense<0.000000e+00> : vector<8x128xf32>
    %3 = tpu.matmul %1, %2, %cst {dimension_numbers = #tpu.dot_dimension_numbers<[1], [0], [0], [1], [0, 0, 1, 1], [], []>} : vector<8x4xbf16>, vector<4x128xbf16>, vector<8x128xf32> -> vector<8x128xf32>
    %c0_3 = arith.constant 0 : index
    %c0_4 = arith.constant 0 : index
    %4 = vector.load %arg3[%c0_3, %c0_4] : memref<1x128xf32, #tpu.memory_space<vmem>>, vector<1x128xf32>
    %5 = vector.broadcast %4 : vector<1x128xf32> to vector<8x128xf32>
    %6 = arith.addf %3, %5 : vector<8x128xf32>
    %7 = math.tanh %6 : vector<8x128xf32>
    %8 = arith.truncf %7 : vector<8x128xf32> to vector<8x128xbf16>
    %c0_5 = arith.constant 0 : index
    %c0_6 = arith.constant 0 : index
    %9 = vector.load %arg4[%c0_5, %c0_6] : memref<128x128xbf16, #tpu.memory_space<vmem>>, vector<128x128xbf16>
    %cst_7 = arith.constant dense<0.000000e+00> : vector<8x128xf32>
    %10 = tpu.matmul %8, %9, %cst_7 {dimension_numbers = #tpu.dot_dimension_numbers<[1], [0], [0], [1], [0, 0, 1, 1], [], []>} : vector<8x128xbf16>, vector<128x128xbf16>, vector<8x128xf32> -> vector<8x128xf32>
    %c0_8 = arith.constant 0 : index
    %c0_9 = arith.constant 0 : index
    %11 = vector.load %arg5[%c0_8, %c0_9] : memref<1x128xf32, #tpu.memory_space<vmem>>, vector<1x128xf32>
    %12 = vector.broadcast %11 : vector<1x128xf32> to vector<8x128xf32>
    %13 = arith.addf %10, %12 : vector<8x128xf32>
    %14 = math.tanh %13 : vector<8x128xf32>
    %15 = arith.truncf %14 : vector<8x128xf32> to vector<8x128xbf16>
    %c0_10 = arith.constant 0 : index
    %c0_11 = arith.constant 0 : index
    %16 = vector.load %arg6[%c0_10, %c0_11] : memref<128x128xbf16, #tpu.memory_space<vmem>>, vector<128x128xbf16>
    %cst_12 = arith.constant dense<0.000000e+00> : vector<8x128xf32>
    %17 = tpu.matmul %15, %16, %cst_12 {dimension_numbers = #tpu.dot_dimension_numbers<[1], [0], [0], [1], [0, 0, 1, 1], [], []>} : vector<8x128xbf16>, vector<128x128xbf16>, vector<8x128xf32> -> vector<8x128xf32>
    %c0_13 = arith.constant 0 : index
    %c0_14 = arith.constant 0 : index
    %18 = vector.load %arg7[%c0_13, %c0_14] : memref<1x128xf32, #tpu.memory_space<vmem>>, vector<1x128xf32>
    %19 = vector.broadcast %18 : vector<1x128xf32> to vector<8x128xf32>
    %20 = arith.addf %17, %19 : vector<8x128xf32>
    %21 = tpu.iota {dimensions = array<i32: 1>} : vector<8x128xi32>
    %c4_i32 = arith.constant 4 : i32
    %22 = vector.broadcast %c4_i32 : i32 to vector<8x128xi32>
    %23 = arith.cmpi slt, %21, %22 : vector<8x128xi32>
    %c4_i32_15 = arith.constant 4 : i32
    %24 = vector.broadcast %c4_i32_15 : i32 to vector<8x128xi32>
    %25 = arith.cmpi sge, %21, %24 : vector<8x128xi32>
    %c12_i32 = arith.constant 12 : i32
    %26 = vector.broadcast %c12_i32 : i32 to vector<8x128xi32>
    %27 = arith.cmpi slt, %21, %26 : vector<8x128xi32>
    %28 = arith.andi %25, %27 : vector<8x128xi1>
    %cst_16 = arith.constant 0xFF800000 : f32
    %29 = vector.broadcast %cst_16 : f32 to vector<8x128xf32>
    %30 = arith.select %23, %20, %29 : vector<8x128xi1>, vector<8x128xf32>
    %cst_17 = arith.constant dense<0xFF800000> : vector<8xf32>
    %31 = vector.multi_reduction <maximumf>, %30, %cst_17 [1] : vector<8x128xf32> to vector<8xf32>
    %32 = vector.shape_cast %31 : vector<8xf32> to vector<8x1xf32>
    %33 = vector.broadcast %32 : vector<8x1xf32> to vector<8x128xf32>
    %34 = arith.subf %20, %33 : vector<8x128xf32>
    %cst_18 = arith.constant 0.000000e+00 : f32
    %35 = vector.broadcast %cst_18 : f32 to vector<8x128xf32>
    %36 = arith.select %28, %20, %35 : vector<8x128xi1>, vector<8x128xf32>
    %37 = arith.select %23, %34, %36 : vector<8x128xi1>, vector<8x128xf32>
    %38 = math.exp %37 : vector<8x128xf32>
    %cst_19 = arith.constant 0.000000e+00 : f32
    %39 = vector.broadcast %cst_19 : f32 to vector<8x128xf32>
    %40 = arith.select %23, %38, %39 : vector<8x128xi1>, vector<8x128xf32>
    %cst_20 = arith.constant dense<0.000000e+00> : vector<8xf32>
    %41 = vector.multi_reduction <add>, %40, %cst_20 [1] : vector<8x128xf32> to vector<8xf32>
    %42 = vector.shape_cast %41 : vector<8xf32> to vector<8x1xf32>
    %43 = tpu.reciprocal %42 : vector<8x1xf32> -> vector<8x1xf32>
    %44 = vector.broadcast %43 : vector<8x1xf32> to vector<8x128xf32>
    %45 = arith.mulf %38, %44 : vector<8x128xf32>
    %46 = arith.select %28, %38, %20 : vector<8x128xi1>, vector<8x128xf32>
    %47 = arith.select %23, %45, %46 : vector<8x128xi1>, vector<8x128xf32>
    %c0_21 = arith.constant 0 : index
    %c0_22 = arith.constant 0 : index
    %48 = vector.load %arg8[%c0_21, %c0_22] : memref<8x128xf32, #tpu.memory_space<vmem>>, vector<8x128xf32>
    tpu.vector_store %arg8[%c0_21, %c0_22], %47 {strides = array<i32>} : memref<8x128xf32, #tpu.memory_space<vmem>>, vector<8x128xf32>,
    return
  }
  func.func @transform_0(%arg0: i32) -> (i32, i32) {
    %c0_i32 = arith.constant 0 : i32
    %c0_i32_0 = arith.constant 0 : i32
    return %arg0, %c0_i32 : i32, i32
  }
  func.func @transform_1(%arg0: i32) -> (i32, i32) {
    %c0_i32 = arith.constant 0 : i32
    %c0_i32_0 = arith.constant 0 : i32
    %c0_i32_1 = arith.constant 0 : i32
    return %c0_i32, %c0_i32_0 : i32, i32
  }
  func.func @transform_2(%arg0: i32) -> (i32, i32) {
    %c0_i32 = arith.constant 0 : i32
    %c0_i32_0 = arith.constant 0 : i32
    %c0_i32_1 = arith.constant 0 : i32
    return %c0_i32, %c0_i32_0 : i32, i32
  }
  func.func @transform_3(%arg0: i32) -> (i32, i32) {
    %c0_i32 = arith.constant 0 : i32
    %c0_i32_0 = arith.constant 0 : i32
    %c0_i32_1 = arith.constant 0 : i32
    return %c0_i32, %c0_i32_0 : i32, i32
  }
  func.func @transform_4(%arg0: i32) -> (i32, i32) {
    %c0_i32 = arith.constant 0 : i32
    %c0_i32_0 = arith.constant 0 : i32
    %c0_i32_1 = arith.constant 0 : i32
    return %c0_i32, %c0_i32_0 : i32, i32
  }
  func.func @transform_5(%arg0: i32) -> (i32, i32) {
    %c0_i32 = arith.constant 0 : i32
    %c0_i32_0 = arith.constant 0 : i32
    %c0_i32_1 = arith.constant 0 : i32
    return %c0_i32, %c0_i32_0 : i32, i32
  }
  func.func @transform_6(%arg0: i32) -> (i32, i32) {
    %c0_i32 = arith.constant 0 : i32
    %c0_i32_0 = arith.constant 0 : i32
    %c0_i32_1 = arith.constant 0 : i32
    return %c0_i32, %c0_i32_0 : i32, i32
  }
  func.func @transform_7(%arg0: i32) -> (i32, i32) {
    %c0_i32 = arith.constant 0 : i32
    %c0_i32_0 = arith.constant 0 : i32
    return %arg0, %c0_i32 : i32, i32
  }
}

module attributes {stable_mosaic.version = 11 : i64} {
  func.func @_mdn_kernel(%arg0: i32, %arg1: memref<8x4xf32, #tpu.memory_space<vmem>>, %arg2: memref<4x128xbf16, #tpu.memory_space<vmem>>, %arg3: memref<1x128xf32, #tpu.memory_space<vmem>>, %arg4: memref<128x128xbf16, #tpu.memory_space<vmem>>, %arg5: memref<1x128xf32, #tpu.memory_space<vmem>>, %arg6: memref<128x128xbf16, #tpu.memory_space<vmem>>, %arg7: memref<1x128xf32, #tpu.memory_space<vmem>>, %arg8: memref<8x128xf32, #tpu.memory_space<vmem>>) attributes {dimension_semantics = [#tpu.dimension_semantics<parallel>], iteration_bounds = array<i64: 2>, scalar_prefetch = 0 : i64, scratch_operands = 0 : i64, tpu.core_type = #tpu.core_type<tc>, window_params = [{transform_indices = @transform_0, window_bounds = array<i64: 8, 4>}, {pipeline_mode = #tpu.pipeline_mode<synchronous>, transform_indices = @transform_1, window_bounds = array<i64: 4, 128>}, {pipeline_mode = #tpu.pipeline_mode<synchronous>, transform_indices = @transform_2, window_bounds = array<i64: 1, 128>}, {pipeline_mode = #tpu.pipeline_mode<synchronous>, transform_indices = @transform_3, window_bounds = array<i64: 128, 128>}, {pipeline_mode = #tpu.pipeline_mode<synchronous>, transform_indices = @transform_4, window_bounds = array<i64: 1, 128>}, {pipeline_mode = #tpu.pipeline_mode<synchronous>, transform_indices = @transform_5, window_bounds = array<i64: 128, 128>}, {pipeline_mode = #tpu.pipeline_mode<synchronous>, transform_indices = @transform_6, window_bounds = array<i64: 1, 128>}, {transform_indices = @transform_7, window_bounds = array<i64: 8, 128>}]} {
    %c0 = arith.constant 0 : index
    %c0_0 = arith.constant 0 : index
    %0 = vector.load %arg1[%c0, %c0_0] : memref<8x4xf32, #tpu.memory_space<vmem>>, vector<8x4xf32>
    %1 = arith.truncf %0 : vector<8x4xf32> to vector<8x4xbf16>
    %c0_1 = arith.constant 0 : index
    %c0_2 = arith.constant 0 : index
    %2 = vector.load %arg2[%c0_1, %c0_2] : memref<4x128xbf16, #tpu.memory_space<vmem>>, vector<4x128xbf16>
    %cst = arith.constant dense<0.000000e+00> : vector<8x128xf32>
    %3 = tpu.matmul %1, %2, %cst {dimension_numbers = #tpu.dot_dimension_numbers<[1], [0], [0], [1], [0, 0, 1, 1], [], []>} : vector<8x4xbf16>, vector<4x128xbf16>, vector<8x128xf32> -> vector<8x128xf32>
    %c0_3 = arith.constant 0 : index
    %c0_4 = arith.constant 0 : index
    %4 = vector.load %arg3[%c0_3, %c0_4] : memref<1x128xf32, #tpu.memory_space<vmem>>, vector<1x128xf32>
    %5 = vector.broadcast %4 : vector<1x128xf32> to vector<8x128xf32>
    %6 = arith.addf %3, %5 : vector<8x128xf32>
    %7 = math.tanh %6 : vector<8x128xf32>
    %8 = arith.truncf %7 : vector<8x128xf32> to vector<8x128xbf16>
    %c0_5 = arith.constant 0 : index
    %c0_6 = arith.constant 0 : index
    %9 = vector.load %arg4[%c0_5, %c0_6] : memref<128x128xbf16, #tpu.memory_space<vmem>>, vector<128x128xbf16>
    %cst_7 = arith.constant dense<0.000000e+00> : vector<8x128xf32>
    %10 = tpu.matmul %8, %9, %cst_7 {dimension_numbers = #tpu.dot_dimension_numbers<[1], [0], [0], [1], [0, 0, 1, 1], [], []>} : vector<8x128xbf16>, vector<128x128xbf16>, vector<8x128xf32> -> vector<8x128xf32>
    %c0_8 = arith.constant 0 : index
    %c0_9 = arith.constant 0 : index
    %11 = vector.load %arg5[%c0_8, %c0_9] : memref<1x128xf32, #tpu.memory_space<vmem>>, vector<1x128xf32>
    %12 = vector.broadcast %11 : vector<1x128xf32> to vector<8x128xf32>
    %13 = arith.addf %10, %12 : vector<8x128xf32>
    %14 = math.tanh %13 : vector<8x128xf32>
    %15 = arith.truncf %14 : vector<8x128xf32> to vector<8x128xbf16>
    %c0_10 = arith.constant 0 : index
    %c0_11 = arith.constant 0 : index
    %16 = vector.load %arg6[%c0_10, %c0_11] : memref<128x128xbf16, #tpu.memory_space<vmem>>, vector<128x128xbf16>
    %cst_12 = arith.constant dense<0.000000e+00> : vector<8x128xf32>
    %17 = tpu.matmul %15, %16, %cst_12 {dimension_numbers = #tpu.dot_dimension_numbers<[1], [0], [0], [1], [0, 0, 1, 1], [], []>} : vector<8x128xbf16>, vector<128x128xbf16>, vector<8x128xf32> -> vector<8x128xf32>
    %c0_13 = arith.constant 0 : index
    %c0_14 = arith.constant 0 : index
    %18 = vector.load %arg7[%c0_13, %c0_14] : memref<1x128xf32, #tpu.memory_space<vmem>>, vector<1x128xf32>
    %19 = vector.broadcast %18 : vector<1x128xf32> to vector<8x128xf32>
    %20 = arith.addf %17, %19 : vector<8x128xf32>
    %21 = tpu.iota {dimensions = array<i32: 1>} : vector<8x128xi32>
    %c4_i32 = arith.constant 4 : i32
    %22 = vector.broadcast %c4_i32 : i32 to vector<8x128xi32>
    %23 = arith.cmpi slt, %21, %22 : vector<8x128xi32>
    %c4_i32_15 = arith.constant 4 : i32
    %24 = vector.broadcast %c4_i32_15 : i32 to vector<8x128xi32>
    %25 = arith.cmpi sge, %21, %24 : vector<8x128xi32>
    %c12_i32 = arith.constant 12 : i32
    %26 = vector.broadcast %c12_i32 : i32 to vector<8x128xi32>
    %27 = arith.cmpi slt, %21, %26 : vector<8x128xi32>
    %28 = arith.andi %25, %27 : vector<8x128xi1>
    %cst_16 = arith.constant 0xFF800000 : f32
    %29 = vector.broadcast %cst_16 : f32 to vector<8x128xf32>
    %30 = arith.select %23, %20, %29 : vector<8x128xi1>, vector<8x128xf32>
    %cst_17 = arith.constant dense<0xFF800000> : vector<8xf32>
    %31 = vector.multi_reduction <maximumf>, %30, %cst_17 [1] : vector<8x128xf32> to vector<8xf32>
    %32 = vector.shape_cast %31 : vector<8xf32> to vector<8x1xf32>
    %33 = vector.broadcast %32 : vector<8x1xf32> to vector<8x128xf32>
    %34 = arith.subf %20, %33 : vector<8x128xf32>
    %cst_18 = arith.constant 0.000000e+00 : f32
    %35 = vector.broadcast %cst_18 : f32 to vector<8x128xf32>
    %36 = arith.select %28, %20, %35 : vector<8x128xi1>, vector<8x128xf32>
    %37 = arith.select %23, %34, %36 : vector<8x128xi1>, vector<8x128xf32>
    %38 = math.exp %37 : vector<8x128xf32>
    %cst_19 = arith.constant 0.000000e+00 : f32
    %39 = vector.broadcast %cst_19 : f32 to vector<8x128xf32>
    %40 = arith.select %23, %38, %39 : vector<8x128xi1>, vector<8x128xf32>
    %cst_20 = arith.constant dense<0.000000e+00> : vector<8xf32>
    %41 = vector.multi_reduction <add>, %40, %cst_20 [1] : vector<8x128xf32> to vector<8xf32>
    %42 = vector.shape_cast %41 : vector<8xf32> to vector<8x1xf32>
    %43 = tpu.reciprocal %42 : vector<8x1xf32> -> vector<8x1xf32>
    %44 = vector.broadcast %43 : vector<8x1xf32> to vector<8x128xf32>
    %45 = arith.mulf %38, %44 : vector<8x128xf32>
    %46 = arith.select %28, %38, %20 : vector<8x128xi1>, vector<8x128xf32>
    %47 = arith.select %23, %45, %46 : vector<8x128xi1>, vector<8x128xf32>
    %c0_21 = arith.constant 0 : index
    %c0_22 = arith.constant 0 : index
    %48 = vector.load %arg8[%c0_21, %c0_22] : memref<8x128xf32, #tpu.memory_space<vmem>>, vector<8x128xf32>
    tpu.vector_store %arg8[%c0_21, %c0_22], %47 {strides = array<i32>} : memref<8x128xf32, #tpu.memory_space<vmem>>, vector<8x128xf32>,
    return
  }
  func.func @transform_0(%arg0: i32) -> (i32, i32) {
    %c0_i32 = arith.constant 0 : i32
    %c0_i32_0 = arith.constant 0 : i32
    return %arg0, %c0_i32 : i32, i32
  }
  func.func @transform_1(%arg0: i32) -> (i32, i32) {
    %c0_i32 = arith.constant 0 : i32
    %c0_i32_0 = arith.constant 0 : i32
    %c0_i32_1 = arith.constant 0 : i32
    return %c0_i32, %c0_i32_0 : i32, i32
  }
  func.func @transform_2(%arg0: i32) -> (i32, i32) {
    %c0_i32 = arith.constant 0 : i32
    %c0_i32_0 = arith.constant 0 : i32
    %c0_i32_1 = arith.constant 0 : i32
    return %c0_i32, %c0_i32_0 : i32, i32
  }
  func.func @transform_3(%arg0: i32) -> (i32, i32) {
    %c0_i32 = arith.constant 0 : i32
    %c0_i32_0 = arith.constant 0 : i32
    %c0_i32_1 = arith.constant 0 : i32
    return %c0_i32, %c0_i32_0 : i32, i32
  }
  func.func @transform_4(%arg0: i32) -> (i32, i32) {
    %c0_i32 = arith.constant 0 : i32
    %c0_i32_0 = arith.constant 0 : i32
    %c0_i32_1 = arith.constant 0 : i32
    return %c0_i32, %c0_i32_0 : i32, i32
  }
  func.func @transform_5(%arg0: i32) -> (i32, i32) {
    %c0_i32 = arith.constant 0 : i32
    %c0_i32_0 = arith.constant 0 : i32
    %c0_i32_1 = arith.constant 0 : i32
    return %c0_i32, %c0_i32_0 : i32, i32
  }
  func.func @transform_6(%arg0: i32) -> (i32, i32) {
    %c0_i32 = arith.constant 0 : i32
    %c0_i32_0 = arith.constant 0 : i32
    %c0_i32_1 = arith.constant 0 : i32
    return %c0_i32, %c0_i32_0 : i32, i32
  }
  func.func @transform_7(%arg0: i32) -> (i32, i32) {
    %c0_i32 = arith.constant 0 : i32
    %c0_i32_0 = arith.constant 0 : i32
    return %arg0, %c0_i32 : i32, i32
  }
}

</mosaic_0001>

<llo_original>
// kernel: tpu_custom_call.1
$region0: #{tpu_custom_call.1}
  #allocation0 [shape = 'u32[]', space=smem, size = 0x4, offset = 0x4, fixed_abs, tag = 'smem constant byte address 0x4 - core index']
  #allocation1 [shape = 'u32[72,128]{1,0:T(1,128)}', space=vmem, size = 0x9000, scoped, tag = 'internal scratch']
  %s0 = inlined_call_operand.vmem [shape: f32[16,4], index: 0, kind: input, shape index: {}]
  %s1 = inlined_call_operand.vmem [shape: bf16[4,128], index: 1, kind: input, shape index: {}]
  %s2 = inlined_call_operand.vmem [shape: f32[1,128], index: 2, kind: input, shape index: {}]
  %s3 = inlined_call_operand.hbm [shape: bf16[128,128], index: 3, kind: input, shape index: {}]
  %s4 = inlined_call_operand.vmem [shape: f32[1,128], index: 4, kind: input, shape index: {}]
  %s5 = inlined_call_operand.hbm [shape: bf16[128,128], index: 5, kind: input, shape index: {}]
  %s6 = inlined_call_operand.vmem [shape: f32[1,128], index: 6, kind: input, shape index: {}]
  %s7 = inlined_call_operand.hbm [shape: f32[16,128], index: 7, kind: output, shape index: {}]
  %s8 = sld [smem:[#allocation0]]
  $region69: #{tpu_custom_call.1} parent=0
    _
  %s10 = ssub.s32 1, %s8
  %s11 = scalar_select 0, %s10, %s8
  $region1: #{tpu_custom_call.1} parent=0
    #allocation2 [shape = 'u8[32768]{0}', space=vmem, size = 0x8000, scoped, tag = 'input window, operand 3, single buffered']
    #allocation3 [shape = 's32[2]{0}', space=sflag, size = 0x8, scoped, tag = 'scoped memory for tpu_custom_call.1']
    #allocation4 [shape = 's32[2]{0}', space=sflag, size = 0x8, scoped, tag = 'scoped memory for tpu_custom_call.1']
    #allocation5 [shape = 'u8[32768]{0}', space=vmem, size = 0x8000, scoped, tag = 'input window, operand 5, single buffered']
    #allocation6 [shape = 's32[1]{0}', space=sflag, size = 0x4, scoped, tag = 'scoped memory for tpu_custom_call.1']
    #allocation7 [shape = 'u8[8192]{0}', space=vmem, size = 0x2000, scoped, tag = 'output window, operand 0']
    %12 = vsyncpa [#allocation3], 0
    %13 = vsyncpa [#allocation6], 0
    %14 = vsyncpa [#allocation4], 0
    %s15 = scalar_lea.sflag [#allocation4], 1
    %16 = vsyncpa %s15, 0
    loop: start=0, step=1, limit=4
    $region2: #{tpu_custom_call.1} parent=1 // loop_pre_header
      _
    $region3: #{tpu_custom_call.1} parent=1 // loop_header
      %s18 = sphi 0, %s22
      %p19 = scmp.ge.s32.totalorder %s18, 4
      %s28 = sphi 0, %s30
      %s31 = sphi 0, %s28
      %s32 = sphi 0, %s31
      %s48 = sphi 0, %s32
      %s52 = sphi 0, %s52
      %s54 = sphi 0, %s52
      %s55 = sphi 0, %s54
      %s69 = sphi 0, %s55
      %s73 = sphi 0, %s73
      %s75 = sphi 0, %s73
      %s76 = sphi 0, %s75
      %s90 = sphi 0, %s76
      %s94 = sphi 0, %s94
      %s96 = sphi 0, %s94
      %s97 = sphi 0, %s96
      %s111 = sphi 0, %s97
      %s115 = sphi 0, %s115
      %s117 = sphi 0, %s115
      %s118 = sphi 0, %s117
      %s132 = sphi 0, %s118
      %s136 = sphi 0, %s136
      %s138 = sphi 0, %s136
      %s139 = sphi 0, %s138
      %s153 = sphi 0, %s139
      %s157 = sphi 0, %s157
      %s159 = sphi 0, %s157
      %s160 = sphi 0, %s159
      %s174 = sphi 0, %s160
      %s180 = sphi 0, %s182
      %s183 = sphi 0, %s180
      %s184 = sphi 0, %s183
      %s200 = sphi 0, %s184
    $region4: #{tpu_custom_call.1} parent=1 // loop_header_branch
      %21 = sbr.rel (%p19) target = $region8
    $region5: #{tpu_custom_call.1} parent=1 // loop_body
      %s23 = ssub.s32 %s18, 1
      %s24 = ssub.s32 %s18, 2
      %s25 = sadd.s32 %s18, 1
      %s26 = ssub.s32 %s18, %s25
      %p27 = scmp.eq.s32.totalorder %s26, 0
      %s29 = sadd.s32 %s28, 1
      %s30 = scalar_select %p27, %s28, %s29
      %p33 = pneg %p27
      %p34 = scmp.eq.s32.totalorder %s18, 1
      %p35 = por %p33, %p34
      %p36 = scmp.ne.s32.totalorder %s28, %s31
      %p37 = scmp.eq.s32.totalorder %s18, 0
      %p38 = por %p36, %p37
      %p39 = scmp.ne.s32.totalorder %s28, %s31
      %p40 = scmp.eq.s32.totalorder %s23, 1
      %p41 = por %p39, %p40
      %p42 = scmp.ne.s32.totalorder %s31, %s32
      %p43 = scmp.eq.s32.totalorder %s23, 0
      %p44 = por %p42, %p43
      %p45 = scmp.ne.s32.totalorder %s31, %s32
      %p46 = scmp.eq.s32.totalorder %s24, 1
      %p47 = por %p45, %p46
      %p49 = scmp.ne.s32.totalorder %s32, %s48
      %p50 = scmp.eq.s32.totalorder %s24, 0
      %p51 = por %p49, %p50
      %s53 = sadd.s32 %s52, 1
      %p56 = scmp.eq.s32.totalorder %s18, 1
      %p57 = scmp.ne.s32.totalorder %s52, %s54
      %p58 = scmp.eq.s32.totalorder %s18, 0
      %p59 = por %p57, %p58
      %p60 = scmp.ne.s32.totalorder %s52, %s54
      %p61 = scmp.eq.s32.totalorder %s23, 1
      %p62 = por %p60, %p61
      %p63 = scmp.ne.s32.totalorder %s54, %s55
      %p64 = scmp.eq.s32.totalorder %s23, 0
      %p65 = por %p63, %p64
      %p66 = scmp.ne.s32.totalorder %s54, %s55
      %p67 = scmp.eq.s32.totalorder %s24, 1
      %p68 = por %p66, %p67
      %p70 = scmp.ne.s32.totalorder %s55, %s69
      %p71 = scmp.eq.s32.totalorder %s24, 0
      %p72 = por %p70, %p71
      %s74 = sadd.s32 %s73, 1
      %p77 = scmp.eq.s32.totalorder %s18, 1
      %p78 = scmp.ne.s32.totalorder %s73, %s75
      %p79 = scmp.eq.s32.totalorder %s18, 0
      %p80 = por %p78, %p79
      %p81 = scmp.ne.s32.totalorder %s73, %s75
      %p82 = scmp.eq.s32.totalorder %s23, 1
      %p83 = por %p81, %p82
      %p84 = scmp.ne.s32.totalorder %s75, %s76
      %p85 = scmp.eq.s32.totalorder %s23, 0
      %p86 = por %p84, %p85
      %p87 = scmp.ne.s32.totalorder %s75, %s76
      %p88 = scmp.eq.s32.totalorder %s24, 1
      %p89 = por %p87, %p88
      %p91 = scmp.ne.s32.totalorder %s76, %s90
      %p92 = scmp.eq.s32.totalorder %s24, 0
      %p93 = por %p91, %p92
      %s95 = sadd.s32 %s94, 1
      %p98 = scmp.eq.s32.totalorder %s18, 1
      %p99 = scmp.ne.s32.totalorder %s94, %s96
      %p100 = scmp.eq.s32.totalorder %s18, 0
      %p101 = por %p99, %p100
      %p102 = scmp.ne.s32.totalorder %s94, %s96
      %p103 = scmp.eq.s32.totalorder %s23, 1
      %p104 = por %p102, %p103
      %p105 = scmp.ne.s32.totalorder %s96, %s97
      %p106 = scmp.eq.s32.totalorder %s23, 0
      %p107 = por %p105, %p106
      %p108 = scmp.ne.s32.totalorder %s96, %s97
      %p109 = scmp.eq.s32.totalorder %s24, 1
      %p110 = por %p108, %p109
      %p112 = scmp.ne.s32.totalorder %s97, %s111
      %p113 = scmp.eq.s32.totalorder %s24, 0
      %p114 = por %p112, %p113
      %s116 = sadd.s32 %s115, 1
      %p119 = scmp.eq.s32.totalorder %s18, 1
      %p120 = scmp.ne.s32.totalorder %s115, %s117
      %p121 = scmp.eq.s32.totalorder %s18, 0
      %p122 = por %p120, %p121
      %p123 = scmp.ne.s32.totalorder %s115, %s117
      %p124 = scmp.eq.s32.totalorder %s23, 1
      %p125 = por %p123, %p124
      %p126 = scmp.ne.s32.totalorder %s117, %s118
      %p127 = scmp.eq.s32.totalorder %s23, 0
      %p128 = por %p126, %p127
      %p129 = scmp.ne.s32.totalorder %s117, %s118
      %p130 = scmp.eq.s32.totalorder %s24, 1
      %p131 = por %p129, %p130
      %p133 = scmp.ne.s32.totalorder %s118, %s132
      %p134 = scmp.eq.s32.totalorder %s24, 0
      %p135 = por %p133, %p134
      %s137 = sadd.s32 %s136, 1
      %p140 = scmp.eq.s32.totalorder %s18, 1
      %p141 = scmp.ne.s32.totalorder %s136, %s138
      %p142 = scmp.eq.s32.totalorder %s18, 0
      %p143 = por %p141, %p142
      %p144 = scmp.ne.s32.totalorder %s136, %s138
      %p145 = scmp.eq.s32.totalorder %s23, 1
      %p146 = por %p144, %p145
      %p147 = scmp.ne.s32.totalorder %s138, %s139
      %p148 = scmp.eq.s32.totalorder %s23, 0
      %p149 = por %p147, %p148
      %p150 = scmp.ne.s32.totalorder %s138, %s139
      %p151 = scmp.eq.s32.totalorder %s24, 1
      %p152 = por %p150, %p151
      %p154 = scmp.ne.s32.totalorder %s139, %s153
      %p155 = scmp.eq.s32.totalorder %s24, 0
      %p156 = por %p154, %p155
      %s158 = sadd.s32 %s157, 1
      %p161 = scmp.eq.s32.totalorder %s18, 1
      %p162 = scmp.ne.s32.totalorder %s157, %s159
      %p163 = scmp.eq.s32.totalorder %s18, 0
      %p164 = por %p162, %p163
      %p165 = scmp.ne.s32.totalorder %s157, %s159
      %p166 = scmp.eq.s32.totalorder %s23, 1
      %p167 = por %p165, %p166
      %p168 = scmp.ne.s32.totalorder %s159, %s160
      %p169 = scmp.eq.s32.totalorder %s23, 0
      %p170 = por %p168, %p169
      %p171 = scmp.ne.s32.totalorder %s159, %s160
      %p172 = scmp.eq.s32.totalorder %s24, 1
      %p173 = por %p171, %p172
      %p175 = scmp.ne.s32.totalorder %s160, %s174
      %p176 = scmp.eq.s32.totalorder %s24, 0
      %p177 = por %p175, %p176
      %s178 = ssub.s32 %s18, %s25
      %p179 = scmp.eq.s32.totalorder %s178, 0
      %s181 = sadd.s32 %s180, 1
      %s182 = scalar_select %p179, %s180, %s181
      %p185 = pneg %p179
      %p186 = scmp.eq.s32.totalorder %s18, 1
      %p187 = por %p185, %p186
      %p188 = scmp.ne.s32.totalorder %s180, %s183
      %p189 = scmp.eq.s32.totalorder %s18, 0
      %p190 = por %p188, %p189
      %p191 = scmp.ne.s32.totalorder %s180, %s183
      %p192 = scmp.eq.s32.totalorder %s23, 1
      %p193 = por %p191, %p192
      %p194 = scmp.ne.s32.totalorder %s183, %s184
      %p195 = scmp.eq.s32.totalorder %s23, 0
      %p196 = por %p194, %p195
      %p197 = scmp.ne.s32.totalorder %s183, %s184
      %p198 = scmp.eq.s32.totalorder %s24, 1
      %p199 = por %p197, %p198
      %p201 = scmp.ne.s32.totalorder %s184, %s200
      %p202 = scmp.eq.s32.totalorder %s24, 0
      %p203 = por %p201, %p202
      %p204 = scmp.le.s32.totalorder 1, %s18
      %p205 = scmp.lt.s32.totalorder %s18, 3
      %p206 = pnand %p204, %p205
      %p207 = pneg %p206
      // Predicated region
      $region9: #{tpu_custom_call.1} parent=5 // pred_check
        _
      $region10: #{tpu_custom_call.1} parent=5 // pred_check_branch
        %209 = sbr.rel (%p206) target = $region12
      $region11: #{tpu_custom_call.1} parent=5 // pred_region
        %s210 = ssub.s32 %s18, 1
        // Predicated region
        $region13: #{tpu_custom_call.1} parent=11 // pred_check
          %p211 = pneg %p65
        $region14: #{tpu_custom_call.1} parent=11 // pred_check_branch
          %213 = sbr.rel (%p211) target = $region16
        $region15: #{tpu_custom_call.1} parent=11 // pred_region
          _
        $region16: #{tpu_custom_call.1} parent=11 // pred_fallthru
          _
        // Predicated region
        $region17: #{tpu_custom_call.1} parent=11 // pred_check
          %p214 = pneg %p86
        $region18: #{tpu_custom_call.1} parent=11 // pred_check_branch
          %216 = sbr.rel (%p214) target = $region20
        $region19: #{tpu_custom_call.1} parent=11 // pred_region
          _
        $region20: #{tpu_custom_call.1} parent=11 // pred_fallthru
          _
        // Predicated region
        $region21: #{tpu_custom_call.1} parent=11 // pred_check
          %p217 = pneg %p107
        $region22: #{tpu_custom_call.1} parent=11 // pred_check_branch
          %219 = sbr.rel (%p217) target = $region24
        $region23: #{tpu_custom_call.1} parent=11 // pred_region
          %221 = vsyncadd [#allocation3], 0
          %s222 = sshll.u32 %s3, 4
          %s223 = int_to_ptr.hbm [resolvable:$true] %s222
          %s224 = sshll.u32 [#allocation2], 4
          %s225 = int_to_ptr.vmem [resolvable:$true] %s224
          %230 = dma.hbm_to_vmem [thread:$0]  %s223, 1024, %s225, [#allocation3], 64, 64, 4
        $region24: #{tpu_custom_call.1} parent=11 // pred_fallthru
          _
        // Predicated region
        $region25: #{tpu_custom_call.1} parent=11 // pred_check
          %p231 = pneg %p128
        $region26: #{tpu_custom_call.1} parent=11 // pred_check_branch
          %233 = sbr.rel (%p231) target = $region28
        $region27: #{tpu_custom_call.1} parent=11 // pred_region
          _
        $region28: #{tpu_custom_call.1} parent=11 // pred_fallthru
          _
        // Predicated region
        $region29: #{tpu_custom_call.1} parent=11 // pred_check
          %p234 = pneg %p149
        $region30: #{tpu_custom_call.1} parent=11 // pred_check_branch
          %236 = sbr.rel (%p234) target = $region32
        $region31: #{tpu_custom_call.1} parent=11 // pred_region
          %238 = vsyncadd [#allocation6], 0
          %s239 = sshll.u32 %s5, 4
          %s240 = int_to_ptr.hbm [resolvable:$true] %s239
          %s241 = sshll.u32 [#allocation5], 4
          %s242 = int_to_ptr.vmem [resolvable:$true] %s241
          %247 = dma.hbm_to_vmem [thread:$0]  %s240, 1024, %s242, [#allocation6], 64, 64, 4
        $region32: #{tpu_custom_call.1} parent=11 // pred_fallthru
          _
        // Predicated region
        $region33: #{tpu_custom_call.1} parent=11 // pred_check
          %p248 = pneg %p170
        $region34: #{tpu_custom_call.1} parent=11 // pred_check_branch
          %250 = sbr.rel (%p248) target = $region36
        $region35: #{tpu_custom_call.1} parent=11 // pred_region
          _
        $region36: #{tpu_custom_call.1} parent=11 // pred_fallthru
          _
      $region12: #{tpu_custom_call.1} parent=5 // pred_fallthru
        _
      %p251 = scmp.lt.s32.totalorder %s18, 2
      // Predicated region
      $region37: #{tpu_custom_call.1} parent=5 // pred_check
        %p252 = pneg %p251
      $region38: #{tpu_custom_call.1} parent=5 // pred_check_branch
        %254 = sbr.rel (%p252) target = $region40
      $region39: #{tpu_custom_call.1} parent=5 // pred_region
        // Predicated region
        $region41: #{tpu_custom_call.1} parent=39 // pred_check
          %p255 = pneg %p38
        $region42: #{tpu_custom_call.1} parent=39 // pred_check_branch
          %257 = sbr.rel (%p255) target = $region44
        $region43: #{tpu_custom_call.1} parent=39 // pred_region
          %p258 = scmp.lt.s32.totalorder %s18, 1
          %s259 = scalar_select %p258, %s18, 1
          %s260 = smul.addr %s259, 8
          %s261 = scalar_lea.vmem %s0, %s260
        $region44: #{tpu_custom_call.1} parent=39 // pred_fallthru
          _
      $region40: #{tpu_custom_call.1} parent=5 // pred_fallthru
        _
      %p262 = scmp.le.s32.totalorder 1, %s18
      %p263 = scmp.lt.s32.totalorder %s18, 3
      %p264 = pnand %p262, %p263
      %p265 = pneg %p264
      // Predicated region
      $region45: #{tpu_custom_call.1} parent=5 // pred_check
        _
      $region46: #{tpu_custom_call.1} parent=5 // pred_check_branch
        %267 = sbr.rel (%p264) target = $region48
      $region47: #{tpu_custom_call.1} parent=5 // pred_region
        %s268 = ssub.s32 %s18, 1
        // Predicated region
        $region49: #{tpu_custom_call.1} parent=47 // pred_check
          %p269 = pneg %p107
        $region50: #{tpu_custom_call.1} parent=47 // pred_check_branch
          %271 = sbr.rel (%p269) target = $region52
        $region51: #{tpu_custom_call.1} parent=47 // pred_region
          %273 = dma.done [#allocation3], 1024
        $region52: #{tpu_custom_call.1} parent=47 // pred_fallthru
          _
        // Predicated region
        $region53: #{tpu_custom_call.1} parent=47 // pred_check
          %p274 = pneg %p149
        $region54: #{tpu_custom_call.1} parent=47 // pred_check_branch
          %276 = sbr.rel (%p274) target = $region56
        $region55: #{tpu_custom_call.1} parent=47 // pred_region
          %278 = dma.done [#allocation6], 1024
        $region56: #{tpu_custom_call.1} parent=47 // pred_fallthru
          _
        %p279 = scmp.lt.s32.totalorder %s23, 1
        %s280 = scalar_select %p279, %s23, 1
        %s281 = smul.addr %s280, 8
        %s282 = scalar_lea.vmem %s0, %s281
        %p283 = pneg %p44
        %p284 = pneg %p41
        %p285 = pneg %p65
        %p286 = pneg %p62
        %p287 = pneg %p86
        %p288 = pneg %p83
        %p289 = pneg %p107
        %p290 = pneg %p104
        %p291 = pneg %p128
        %p292 = pneg %p125
        %p293 = pneg %p149
        %p294 = pneg %p146
        %p295 = pneg %p170
        %p296 = pneg %p167
        %p297 = pneg %p196
        %p298 = pneg %p193
        %s299 = sand.u32 %s183, 1
        %s300 = scalar_lea.sflag [#allocation4], %s299
        %s301 = sand.u32 %s183, 1
        %s302 = smul.addr %s301, 8
        %s303 = scalar_lea.vmem [#allocation7], %s302
        %p304 = scmp.lt.s32.totalorder %s23, 1
        %s305 = scalar_select %p304, %s23, 1
        %s306 = smul.addr %s305, 8
        %s307 = scalar_lea.vmem %s0, %s306
        %v309 = vld [vmem:[%s307] sm:$0xff]
        %v310 = vpack.c.bf16 %v309, %v309
        %v311 = vld [vmem:[%s1] sm:$0x3]
        %v312 = vld [vmem:[%s2] sm:$0x1]
        %v314 = vperm.slane %v312, 0
        %vm316 = vcmask 31744
        %v318 = vsel %vm316, %v310, 0
        %vm320 = vcmask 1041408
        %v322 = vsel %vm320, %v311, 0
        %324 = vmatpush.bf16.msra.mxu0 0
        %325 = vmatpush.bf16.msra.mxu0 0
        %326 = vmatpush.bf16.msra.mxu0 0
        %327 = vmatpush.bf16.msra.mxu0 0
        %328 = vmatpush.bf16.msra.mxu0 0
        %329 = vmatpush.bf16.msra.mxu0 0
        %330 = vmatpush.bf16.msra.mxu0 0
        %331 = vmatpush.bf16.msra.mxu0 %v322
        %332 = vmatmul.bf16.gmra.mxu0 %v318
        %v333 = vpop.f32.mrf.mxu0
        %v334 = vadd.f32 %v314, %v333
        %v335 = vpop.f32.mrf.mxu0
        %336 = vdwg.mxu0
        %v337 = vtanh.pop %v334
        %v338 = vpack.c.bf16 %v337, %v337
        %v339 = vld [vmem:[#allocation2] sm:$0xf]
        %v340 = vld [vmem:[#allocation2 + $0x4] sm:$0xf]
        %v341 = vld [vmem:[#allocation2 + $0x8] sm:$0xf]
        %v342 = vld [vmem:[#allocation2 + $0xc] sm:$0xf]
        %v343 = vld [vmem:[#allocation2 + $0x10] sm:$0xf]
        %v344 = vld [vmem:[#allocation2 + $0x14] sm:$0xf]
        %v345 = vld [vmem:[#allocation2 + $0x18] sm:$0xf]
        %v346 = vld [vmem:[#allocation2 + $0x1c] sm:$0xf]
        %v347 = vld [vmem:[#allocation2 + $0x20] sm:$0xf]
        %v348 = vld [vmem:[#allocation2 + $0x24] sm:$0xf]
        %v349 = vld [vmem:[#allocation2 + $0x28] sm:$0xf]
        %v350 = vld [vmem:[#allocation2 + $0x2c] sm:$0xf]
        %v351 = vld [vmem:[#allocation2 + $0x30] sm:$0xf]
        %v352 = vld [vmem:[#allocation2 + $0x34] sm:$0xf]
        %v353 = vld [vmem:[#allocation2 + $0x38] sm:$0xf]
        %v354 = vld [vmem:[#allocation2 + $0x3c] sm:$0xf]
        %v355 = vld [vmem:[%s4] sm:$0x1]
        %v357 = vperm.slane %v355, 0
        %v375 = vunpack.c.l.b16 %v339
        %v376 = vunpack.c.l.b16 %v340
        %v377 = vunpack.c.l.b16 %v341
        %v378 = vunpack.c.l.b16 %v342
        %v379 = vunpack.c.l.b16 %v343
        %v380 = vunpack.c.l.b16 %v344
        %v381 = vunpack.c.l.b16 %v345
        %v382 = vunpack.c.l.b16 %v346
        %v383 = vunpack.c.l.b16 %v347
        %v384 = vunpack.c.l.b16 %v348
        %v385 = vunpack.c.l.b16 %v349
        %v386 = vunpack.c.l.b16 %v350
        %v387 = vunpack.c.l.b16 %v351
        %v388 = vunpack.c.l.b16 %v352
        %v389 = vunpack.c.l.b16 %v353
        %v390 = vunpack.c.l.b16 %v354
        %v391 = vpack.c.b16 %v376, %v375
        %v392 = vpack.c.b16 %v378, %v377
        %v393 = vpack.c.b16 %v380, %v379
        %v394 = vpack.c.b16 %v382, %v381
        %v395 = vpack.c.b16 %v384, %v383
        %v396 = vpack.c.b16 %v386, %v385
        %v397 = vpack.c.b16 %v388, %v387
        %v398 = vpack.c.b16 %v390, %v389
        %407 = vmatpush.bf16.msra.mxu0 %v398
        %408 = vmatpush.bf16.msra.mxu0 %v397
        %409 = vmatpush.bf16.msra.mxu0 %v396
        %410 = vmatpush.bf16.msra.mxu0 %v395
        %411 = vmatpush.bf16.msra.mxu0 %v394
        %412 = vmatpush.bf16.msra.mxu0 %v393
        %413 = vmatpush.bf16.msra.mxu0 %v392
        %414 = vmatpush.bf16.msra.mxu0 %v391
        %415 = vmatmul.bf16.gmra.mxu0 %v338
        %v416 = vpop.f32.mrf.mxu0
        %v417 = vadd.f32 %v357, %v416
        %v418 = vpop.f32.mrf.mxu0
        %419 = vdwg.mxu0
        %v420 = vtanh.pop %v417
        %v421 = vpack.c.bf16 %v420, %v420
        %v422 = vld [vmem:[#allocation5] sm:$0xf]
        %v423 = vld [vmem:[#allocation5 + $0x4] sm:$0xf]
        %v424 = vld [vmem:[#allocation5 + $0x8] sm:$0xf]
        %v425 = vld [vmem:[#allocation5 + $0xc] sm:$0xf]
        %v426 = vld [vmem:[#allocation5 + $0x10] sm:$0xf]
        %v427 = vld [vmem:[#allocation5 + $0x14] sm:$0xf]
        %v428 = vld [vmem:[#allocation5 + $0x18] sm:$0xf]
        %v429 = vld [vmem:[#allocation5 + $0x1c] sm:$0xf]
        %v430 = vld [vmem:[#allocation5 + $0x20] sm:$0xf]
        %v431 = vld [vmem:[#allocation5 + $0x24] sm:$0xf]
        %v432 = vld [vmem:[#allocation5 + $0x28] sm:$0xf]
        %v433 = vld [vmem:[#allocation5 + $0x2c] sm:$0xf]
        %v434 = vld [vmem:[#allocation5 + $0x30] sm:$0xf]
        %v435 = vld [vmem:[#allocation5 + $0x34] sm:$0xf]
        %v436 = vld [vmem:[#allocation5 + $0x38] sm:$0xf]
        %v437 = vld [vmem:[#allocation5 + $0x3c] sm:$0xf]
        %v438 = vld [vmem:[%s6] sm:$0x1]
        %v440 = vperm.slane %v438, 0
        %v458 = vunpack.c.l.b16 %v422
        %v459 = vunpack.c.l.b16 %v423
        %v460 = vunpack.c.l.b16 %v424
        %v461 = vunpack.c.l.b16 %v425
        %v462 = vunpack.c.l.b16 %v426
        %v463 = vunpack.c.l.b16 %v427
        %v464 = vunpack.c.l.b16 %v428
        %v465 = vunpack.c.l.b16 %v429
        %v466 = vunpack.c.l.b16 %v430
        %v467 = vunpack.c.l.b16 %v431
        %v468 = vunpack.c.l.b16 %v432
        %v469 = vunpack.c.l.b16 %v433
        %v470 = vunpack.c.l.b16 %v434
        %v471 = vunpack.c.l.b16 %v435
        %v472 = vunpack.c.l.b16 %v436
        %v473 = vunpack.c.l.b16 %v437
        %v474 = vpack.c.b16 %v459, %v458
        %v475 = vpack.c.b16 %v461, %v460
        %v476 = vpack.c.b16 %v463, %v462
        %v477 = vpack.c.b16 %v465, %v464
        %v478 = vpack.c.b16 %v467, %v466
        %v479 = vpack.c.b16 %v469, %v468
        %v480 = vpack.c.b16 %v471, %v470
        %v481 = vpack.c.b16 %v473, %v472
        %490 = vmatpush.bf16.msra.mxu0 %v481
        %491 = vmatpush.bf16.msra.mxu0 %v480
        %492 = vmatpush.bf16.msra.mxu0 %v479
        %493 = vmatpush.bf16.msra.mxu0 %v478
        %494 = vmatpush.bf16.msra.mxu0 %v477
        %495 = vmatpush.bf16.msra.mxu0 %v476
        %496 = vmatpush.bf16.msra.mxu0 %v475
        %497 = vmatpush.bf16.msra.mxu0 %v474
        %498 = vmatmul.bf16.gmra.mxu0 %v421
        %v499 = vpop.f32.mrf.mxu0
        %v500 = vadd.f32 %v440, %v499
        %v501 = vpop.f32.mrf.mxu0
        %502 = vdwg.mxu0
        %v503 = vlaneseq
        %v504 = vand.u32 %v503, 127
        %vm505 = vcmp.lt.s32.totalorder %v504, 4
        %vm506 = vcmp.ge.s32.totalorder %v504, 4
        %vm507 = vcmp.lt.s32.totalorder %v504, 12
        %vm508 = vmand %vm506, %vm507
        %v509 = vsel %vm505, %v500, -inf
        %510 = vmax.xlane.f32.xlu0 %v509
        %v511 = vpop.xlane.xlu0 %510
        %v512 = vsub.f32 %v500, %v511
        %v513 = vsel %vm508, %v500, 0.0
        %v514 = vsel %vm505, %v512, %v513
        %v515 = vmul.f32 %v514, 1.442695
        %v516 = vpow.pop %v515
        %v517 = vsel %vm505, %v516, 0.0
        %518 = vadd.xlane.f32.xlu0 %v517
        %v519 = vpop.xlane.xlu0 %518
        %v520 = vrcp.pop %v519
        %v521 = vmul.f32 %v519, %v520
        %v522 = vsub.f32 1.0, %v521
        %v523 = vmul.f32 %v520, %v522
        %v524 = vadd.f32 %v520, %v523
        %vm525 = vweird.f32 %v519
        %vm526 = vweird.f32 %v520
        %vm527 = vmor %vm525, %vm526
        %v528 = vsel %vm527, %v520, %v524
        %v529 = vand.u32 2147483647, %v519
        %vm530 = vcmp.eq.f32.partialorder %v529, 8.507059e+37
        %v531 = vand.u32 %v519, 2147483648
        %v532 = vor.u32 1.1754944e-38, %v531
        %v533 = vsel %vm530, %v532, %v528
        %v534 = vmul.f32 %v516, %v533
        %v535 = vsel %vm508, %v516, %v500
        %v536 = vsel %vm505, %v534, %v535
        %537 = vst [vmem:[%s303] sm:$0xff] %v536
        %s538 = sand.u32 %s183, 1
        %s539 = scalar_lea.sflag [#allocation4], %s538
        %s540 = sand.u32 %s183, 1
        %s541 = smul.addr %s540, 8
        %s542 = scalar_lea.vmem [#allocation7], %s541
        // Predicated region
        $region57: #{tpu_custom_call.1} parent=47 // pred_check
          %p543 = pneg %p193
        $region58: #{tpu_custom_call.1} parent=47 // pred_check_branch
          %545 = sbr.rel (%p543) target = $region60
        $region59: #{tpu_custom_call.1} parent=47 // pred_region
          %547 = vsyncadd %s539, 0
          %s548 = smul.addr %s23, 8
          %s549 = scalar_lea.hbm %s7, %s548
          %s551 = sshll.u32 %s542, 4
          %s552 = int_to_ptr.vmem [resolvable:$true] %s551
          %s553 = sshll.u32 %s549, 4
          %s554 = int_to_ptr.hbm [resolvable:$true] %s553
          %556 = dma.vmem_to_hbm [thread:$0]  %s552, 128, %s554, %s539
        $region60: #{tpu_custom_call.1} parent=47 // pred_fallthru
          _
      $region48: #{tpu_custom_call.1} parent=5 // pred_fallthru
        _
      %p557 = scmp.le.s32.totalorder 2, %s18
      // Predicated region
      $region61: #{tpu_custom_call.1} parent=5 // pred_check
        %p558 = pneg %p557
      $region62: #{tpu_custom_call.1} parent=5 // pred_check_branch
        %560 = sbr.rel (%p558) target = $region64
      $region63: #{tpu_custom_call.1} parent=5 // pred_region
        %s561 = ssub.s32 %s18, 2
        // Predicated region
        $region65: #{tpu_custom_call.1} parent=63 // pred_check
          %p562 = pneg %p199
        $region66: #{tpu_custom_call.1} parent=63 // pred_check_branch
          %564 = sbr.rel (%p562) target = $region68
        $region67: #{tpu_custom_call.1} parent=63 // pred_region
          %s565 = sand.u32 %s184, 1
          %s566 = scalar_lea.sflag [#allocation4], %s565
          %s567 = sand.u32 %s184, 1
          %s568 = smul.addr %s567, 8
          %s569 = scalar_lea.vmem [#allocation7], %s568
          %571 = dma.done %s566, 128
        $region68: #{tpu_custom_call.1} parent=63 // pred_fallthru
          _
      $region64: #{tpu_custom_call.1} parent=5 // pred_fallthru
        _
    $region6: #{tpu_custom_call.1} parent=1 // loop_footer
      %s22 = sadd.s32 1, %s18
    $region7: #{tpu_custom_call.1} parent=1 // loop_footer_branch
      %17 = sbr.rel target = $region3
    $region8: #{tpu_custom_call.1} parent=1 // loop_exit
      _
    %572 = vsyncpa [#allocation3], 1
    %s573 = scalar_lea.sflag [#allocation3], 1
    %574 = vsyncpa %s573, 1
    %575 = vsyncpa [#allocation6], 1
    %576 = vsyncpa [#allocation4], 1
    %s577 = scalar_lea.sflag [#allocation4], 1
    %578 = vsyncpa %s577, 1

// kernel: tpu_custom_call.1
$region0: #{tpu_custom_call.1}
  #allocation0 [shape = 'u32[]', space=smem, size = 0x4, offset = 0x4, fixed_abs, tag = 'smem constant byte address 0x4 - core index']
  #allocation1 [shape = 'u32[72,128]{1,0:T(1,128)}', space=vmem, size = 0x9000, scoped, tag = 'internal scratch']
  %s0 = inlined_call_operand.vmem [shape: f32[16,4], index: 0, kind: input, shape index: {}]
  %s1 = inlined_call_operand.vmem [shape: bf16[4,128], index: 1, kind: input, shape index: {}]
  %s2 = inlined_call_operand.vmem [shape: f32[1,128], index: 2, kind: input, shape index: {}]
  %s3 = inlined_call_operand.hbm [shape: bf16[128,128], index: 3, kind: input, shape index: {}]
  %s4 = inlined_call_operand.vmem [shape: f32[1,128], index: 4, kind: input, shape index: {}]
  %s5 = inlined_call_operand.hbm [shape: bf16[128,128], index: 5, kind: input, shape index: {}]
  %s6 = inlined_call_operand.vmem [shape: f32[1,128], index: 6, kind: input, shape index: {}]
  %s7 = inlined_call_operand.hbm [shape: f32[16,128], index: 7, kind: output, shape index: {}]
  %s8 = sld [smem:[#allocation0]]
  $region69: #{tpu_custom_call.1} parent=0
    _
  %s10 = ssub.s32 1, %s8
  %s11 = scalar_select 0, %s10, %s8
  $region1: #{tpu_custom_call.1} parent=0
    #allocation2 [shape = 'u8[32768]{0}', space=vmem, size = 0x8000, scoped, tag = 'input window, operand 3, single buffered']
    #allocation3 [shape = 's32[2]{0}', space=sflag, size = 0x8, scoped, tag = 'scoped memory for tpu_custom_call.1']
    #allocation4 [shape = 's32[2]{0}', space=sflag, size = 0x8, scoped, tag = 'scoped memory for tpu_custom_call.1']
    #allocation5 [shape = 'u8[32768]{0}', space=vmem, size = 0x8000, scoped, tag = 'input window, operand 5, single buffered']
    #allocation6 [shape = 's32[1]{0}', space=sflag, size = 0x4, scoped, tag = 'scoped memory for tpu_custom_call.1']
    #allocation7 [shape = 'u8[8192]{0}', space=vmem, size = 0x2000, scoped, tag = 'output window, operand 0']
    %12 = vsyncpa [#allocation3], 0
    %13 = vsyncpa [#allocation6], 0
    %14 = vsyncpa [#allocation4], 0
    %s15 = scalar_lea.sflag [#allocation4], 1
    %16 = vsyncpa %s15, 0
    loop: start=0, step=1, limit=4
    $region2: #{tpu_custom_call.1} parent=1 // loop_pre_header
      _
    $region3: #{tpu_custom_call.1} parent=1 // loop_header
      %s18 = sphi 0, %s22
      %p19 = scmp.ge.s32.totalorder %s18, 4
      %s28 = sphi 0, %s30
      %s31 = sphi 0, %s28
      %s32 = sphi 0, %s31
      %s48 = sphi 0, %s32
      %s52 = sphi 0, %s52
      %s54 = sphi 0, %s52
      %s55 = sphi 0, %s54
      %s69 = sphi 0, %s55
      %s73 = sphi 0, %s73
      %s75 = sphi 0, %s73
      %s76 = sphi 0, %s75
      %s90 = sphi 0, %s76
      %s94 = sphi 0, %s94
      %s96 = sphi 0, %s94
      %s97 = sphi 0, %s96
      %s111 = sphi 0, %s97
      %s115 = sphi 0, %s115
      %s117 = sphi 0, %s115
      %s118 = sphi 0, %s117
      %s132 = sphi 0, %s118
      %s136 = sphi 0, %s136
      %s138 = sphi 0, %s136
      %s139 = sphi 0, %s138
      %s153 = sphi 0, %s139
      %s157 = sphi 0, %s157
      %s159 = sphi 0, %s157
      %s160 = sphi 0, %s159
      %s174 = sphi 0, %s160
      %s180 = sphi 0, %s182
      %s183 = sphi 0, %s180
      %s184 = sphi 0, %s183
      %s200 = sphi 0, %s184
    $region4: #{tpu_custom_call.1} parent=1 // loop_header_branch
      %21 = sbr.rel (%p19) target = $region8
    $region5: #{tpu_custom_call.1} parent=1 // loop_body
      %s23 = ssub.s32 %s18, 1
      %s24 = ssub.s32 %s18, 2
      %s25 = sadd.s32 %s18, 1
      %s26 = ssub.s32 %s18, %s25
      %p27 = scmp.eq.s32.totalorder %s26, 0
      %s29 = sadd.s32 %s28, 1
      %s30 = scalar_select %p27, %s28, %s29
      %p33 = pneg %p27
      %p34 = scmp.eq.s32.totalorder %s18, 1
      %p35 = por %p33, %p34
      %p36 = scmp.ne.s32.totalorder %s28, %s31
      %p37 = scmp.eq.s32.totalorder %s18, 0
      %p38 = por %p36, %p37
      %p39 = scmp.ne.s32.totalorder %s28, %s31
      %p40 = scmp.eq.s32.totalorder %s23, 1
      %p41 = por %p39, %p40
      %p42 = scmp.ne.s32.totalorder %s31, %s32
      %p43 = scmp.eq.s32.totalorder %s23, 0
      %p44 = por %p42, %p43
      %p45 = scmp.ne.s32.totalorder %s31, %s32
      %p46 = scmp.eq.s32.totalorder %s24, 1
      %p47 = por %p45, %p46
      %p49 = scmp.ne.s32.totalorder %s32, %s48
      %p50 = scmp.eq.s32.totalorder %s24, 0
      %p51 = por %p49, %p50
      %s53 = sadd.s32 %s52, 1
      %p56 = scmp.eq.s32.totalorder %s18, 1
      %p57 = scmp.ne.s32.totalorder %s52, %s54
      %p58 = scmp.eq.s32.totalorder %s18, 0
      %p59 = por %p57, %p58
      %p60 = scmp.ne.s32.totalorder %s52, %s54
      %p61 = scmp.eq.s32.totalorder %s23, 1
      %p62 = por %p60, %p61
      %p63 = scmp.ne.s32.totalorder %s54, %s55
      %p64 = scmp.eq.s32.totalorder %s23, 0
      %p65 = por %p63, %p64
      %p66 = scmp.ne.s32.totalorder %s54, %s55
      %p67 = scmp.eq.s32.totalorder %s24, 1
      %p68 = por %p66, %p67
      %p70 = scmp.ne.s32.totalorder %s55, %s69
      %p71 = scmp.eq.s32.totalorder %s24, 0
      %p72 = por %p70, %p71
      %s74 = sadd.s32 %s73, 1
      %p77 = scmp.eq.s32.totalorder %s18, 1
      %p78 = scmp.ne.s32.totalorder %s73, %s75
      %p79 = scmp.eq.s32.totalorder %s18, 0
      %p80 = por %p78, %p79
      %p81 = scmp.ne.s32.totalorder %s73, %s75
      %p82 = scmp.eq.s32.totalorder %s23, 1
      %p83 = por %p81, %p82
      %p84 = scmp.ne.s32.totalorder %s75, %s76
      %p85 = scmp.eq.s32.totalorder %s23, 0
      %p86 = por %p84, %p85
      %p87 = scmp.ne.s32.totalorder %s75, %s76
      %p88 = scmp.eq.s32.totalorder %s24, 1
      %p89 = por %p87, %p88
      %p91 = scmp.ne.s32.totalorder %s76, %s90
      %p92 = scmp.eq.s32.totalorder %s24, 0
      %p93 = por %p91, %p92
      %s95 = sadd.s32 %s94, 1
      %p98 = scmp.eq.s32.totalorder %s18, 1
      %p99 = scmp.ne.s32.totalorder %s94, %s96
      %p100 = scmp.eq.s32.totalorder %s18, 0
      %p101 = por %p99, %p100
      %p102 = scmp.ne.s32.totalorder %s94, %s96
      %p103 = scmp.eq.s32.totalorder %s23, 1
      %p104 = por %p102, %p103
      %p105 = scmp.ne.s32.totalorder %s96, %s97
      %p106 = scmp.eq.s32.totalorder %s23, 0
      %p107 = por %p105, %p106
      %p108 = scmp.ne.s32.totalorder %s96, %s97
      %p109 = scmp.eq.s32.totalorder %s24, 1
      %p110 = por %p108, %p109
      %p112 = scmp.ne.s32.totalorder %s97, %s111
      %p113 = scmp.eq.s32.totalorder %s24, 0
      %p114 = por %p112, %p113
      %s116 = sadd.s32 %s115, 1
      %p119 = scmp.eq.s32.totalorder %s18, 1
      %p120 = scmp.ne.s32.totalorder %s115, %s117
      %p121 = scmp.eq.s32.totalorder %s18, 0
      %p122 = por %p120, %p121
      %p123 = scmp.ne.s32.totalorder %s115, %s117
      %p124 = scmp.eq.s32.totalorder %s23, 1
      %p125 = por %p123, %p124
      %p126 = scmp.ne.s32.totalorder %s117, %s118
      %p127 = scmp.eq.s32.totalorder %s23, 0
      %p128 = por %p126, %p127
      %p129 = scmp.ne.s32.totalorder %s117, %s118
      %p130 = scmp.eq.s32.totalorder %s24, 1
      %p131 = por %p129, %p130
      %p133 = scmp.ne.s32.totalorder %s118, %s132
      %p134 = scmp.eq.s32.totalorder %s24, 0
      %p135 = por %p133, %p134
      %s137 = sadd.s32 %s136, 1
      %p140 = scmp.eq.s32.totalorder %s18, 1
      %p141 = scmp.ne.s32.totalorder %s136, %s138
      %p142 = scmp.eq.s32.totalorder %s18, 0
      %p143 = por %p141, %p142
      %p144 = scmp.ne.s32.totalorder %s136, %s138
      %p145 = scmp.eq.s32.totalorder %s23, 1
      %p146 = por %p144, %p145
      %p147 = scmp.ne.s32.totalorder %s138, %s139
      %p148 = scmp.eq.s32.totalorder %s23, 0
      %p149 = por %p147, %p148
      %p150 = scmp.ne.s32.totalorder %s138, %s139
      %p151 = scmp.eq.s32.totalorder %s24, 1
      %p152 = por %p150, %p151
      %p154 = scmp.ne.s32.totalorder %s139, %s153
      %p155 = scmp.eq.s32.totalorder %s24, 0
      %p156 = por %p154, %p155
      %s158 = sadd.s32 %s157, 1
      %p161 = scmp.eq.s32.totalorder %s18, 1
      %p162 = scmp.ne.s32.totalorder %s157, %s159
      %p163 = scmp.eq.s32.totalorder %s18, 0
      %p164 = por %p162, %p163
      %p165 = scmp.ne.s32.totalorder %s157, %s159
      %p166 = scmp.eq.s32.totalorder %s23, 1
      %p167 = por %p165, %p166
      %p168 = scmp.ne.s32.totalorder %s159, %s160
      %p169 = scmp.eq.s32.totalorder %s23, 0
      %p170 = por %p168, %p169
      %p171 = scmp.ne.s32.totalorder %s159, %s160
      %p172 = scmp.eq.s32.totalorder %s24, 1
      %p173 = por %p171, %p172
      %p175 = scmp.ne.s32.totalorder %s160, %s174
      %p176 = scmp.eq.s32.totalorder %s24, 0
      %p177 = por %p175, %p176
      %s178 = ssub.s32 %s18, %s25
      %p179 = scmp.eq.s32.totalorder %s178, 0
      %s181 = sadd.s32 %s180, 1
      %s182 = scalar_select %p179, %s180, %s181
      %p185 = pneg %p179
      %p186 = scmp.eq.s32.totalorder %s18, 1
      %p187 = por %p185, %p186
      %p188 = scmp.ne.s32.totalorder %s180, %s183
      %p189 = scmp.eq.s32.totalorder %s18, 0
      %p190 = por %p188, %p189
      %p191 = scmp.ne.s32.totalorder %s180, %s183
      %p192 = scmp.eq.s32.totalorder %s23, 1
      %p193 = por %p191, %p192
      %p194 = scmp.ne.s32.totalorder %s183, %s184
      %p195 = scmp.eq.s32.totalorder %s23, 0
      %p196 = por %p194, %p195
      %p197 = scmp.ne.s32.totalorder %s183, %s184
      %p198 = scmp.eq.s32.totalorder %s24, 1
      %p199 = por %p197, %p198
      %p201 = scmp.ne.s32.totalorder %s184, %s200
      %p202 = scmp.eq.s32.totalorder %s24, 0
      %p203 = por %p201, %p202
      %p204 = scmp.le.s32.totalorder 1, %s18
      %p205 = scmp.lt.s32.totalorder %s18, 3
      %p206 = pnand %p204, %p205
      %p207 = pneg %p206
      // Predicated region
      $region9: #{tpu_custom_call.1} parent=5 // pred_check
        _
      $region10: #{tpu_custom_call.1} parent=5 // pred_check_branch
        %209 = sbr.rel (%p206) target = $region12
      $region11: #{tpu_custom_call.1} parent=5 // pred_region
        %s210 = ssub.s32 %s18, 1
        // Predicated region
        $region13: #{tpu_custom_call.1} parent=11 // pred_check
          %p211 = pneg %p65
        $region14: #{tpu_custom_call.1} parent=11 // pred_check_branch
          %213 = sbr.rel (%p211) target = $region16
        $region15: #{tpu_custom_call.1} parent=11 // pred_region
          _
        $region16: #{tpu_custom_call.1} parent=11 // pred_fallthru
          _
        // Predicated region
        $region17: #{tpu_custom_call.1} parent=11 // pred_check
          %p214 = pneg %p86
        $region18: #{tpu_custom_call.1} parent=11 // pred_check_branch
          %216 = sbr.rel (%p214) target = $region20
        $region19: #{tpu_custom_call.1} parent=11 // pred_region
          _
        $region20: #{tpu_custom_call.1} parent=11 // pred_fallthru
          _
        // Predicated region
        $region21: #{tpu_custom_call.1} parent=11 // pred_check
          %p217 = pneg %p107
        $region22: #{tpu_custom_call.1} parent=11 // pred_check_branch
          %219 = sbr.rel (%p217) target = $region24
        $region23: #{tpu_custom_call.1} parent=11 // pred_region
          %221 = vsyncadd [#allocation3], 0
          %s222 = sshll.u32 %s3, 4
          %s223 = int_to_ptr.hbm [resolvable:$true] %s222
          %s224 = sshll.u32 [#allocation2], 4
          %s225 = int_to_ptr.vmem [resolvable:$true] %s224
          %230 = dma.hbm_to_vmem [thread:$0]  %s223, 1024, %s225, [#allocation3], 64, 64, 4
        $region24: #{tpu_custom_call.1} parent=11 // pred_fallthru
          _
        // Predicated region
        $region25: #{tpu_custom_call.1} parent=11 // pred_check
          %p231 = pneg %p128
        $region26: #{tpu_custom_call.1} parent=11 // pred_check_branch
          %233 = sbr.rel (%p231) target = $region28
        $region27: #{tpu_custom_call.1} parent=11 // pred_region
          _
        $region28: #{tpu_custom_call.1} parent=11 // pred_fallthru
          _
        // Predicated region
        $region29: #{tpu_custom_call.1} parent=11 // pred_check
          %p234 = pneg %p149
        $region30: #{tpu_custom_call.1} parent=11 // pred_check_branch
          %236 = sbr.rel (%p234) target = $region32
        $region31: #{tpu_custom_call.1} parent=11 // pred_region
          %238 = vsyncadd [#allocation6], 0
          %s239 = sshll.u32 %s5, 4
          %s240 = int_to_ptr.hbm [resolvable:$true] %s239
          %s241 = sshll.u32 [#allocation5], 4
          %s242 = int_to_ptr.vmem [resolvable:$true] %s241
          %247 = dma.hbm_to_vmem [thread:$0]  %s240, 1024, %s242, [#allocation6], 64, 64, 4
        $region32: #{tpu_custom_call.1} parent=11 // pred_fallthru
          _
        // Predicated region
        $region33: #{tpu_custom_call.1} parent=11 // pred_check
          %p248 = pneg %p170
        $region34: #{tpu_custom_call.1} parent=11 // pred_check_branch
          %250 = sbr.rel (%p248) target = $region36
        $region35: #{tpu_custom_call.1} parent=11 // pred_region
          _
        $region36: #{tpu_custom_call.1} parent=11 // pred_fallthru
          _
      $region12: #{tpu_custom_call.1} parent=5 // pred_fallthru
        _
      %p251 = scmp.lt.s32.totalorder %s18, 2
      // Predicated region
      $region37: #{tpu_custom_call.1} parent=5 // pred_check
        %p252 = pneg %p251
      $region38: #{tpu_custom_call.1} parent=5 // pred_check_branch
        %254 = sbr.rel (%p252) target = $region40
      $region39: #{tpu_custom_call.1} parent=5 // pred_region
        // Predicated region
        $region41: #{tpu_custom_call.1} parent=39 // pred_check
          %p255 = pneg %p38
        $region42: #{tpu_custom_call.1} parent=39 // pred_check_branch
          %257 = sbr.rel (%p255) target = $region44
        $region43: #{tpu_custom_call.1} parent=39 // pred_region
          %p258 = scmp.lt.s32.totalorder %s18, 1
          %s259 = scalar_select %p258, %s18, 1
          %s260 = smul.addr %s259, 8
          %s261 = scalar_lea.vmem %s0, %s260
        $region44: #{tpu_custom_call.1} parent=39 // pred_fallthru
          _
      $region40: #{tpu_custom_call.1} parent=5 // pred_fallthru
        _
      %p262 = scmp.le.s32.totalorder 1, %s18
      %p263 = scmp.lt.s32.totalorder %s18, 3
      %p264 = pnand %p262, %p263
      %p265 = pneg %p264
      // Predicated region
      $region45: #{tpu_custom_call.1} parent=5 // pred_check
        _
      $region46: #{tpu_custom_call.1} parent=5 // pred_check_branch
        %267 = sbr.rel (%p264) target = $region48
      $region47: #{tpu_custom_call.1} parent=5 // pred_region
        %s268 = ssub.s32 %s18, 1
        // Predicated region
        $region49: #{tpu_custom_call.1} parent=47 // pred_check
          %p269 = pneg %p107
        $region50: #{tpu_custom_call.1} parent=47 // pred_check_branch
          %271 = sbr.rel (%p269) target = $region52
        $region51: #{tpu_custom_call.1} parent=47 // pred_region
          %273 = dma.done [#allocation3], 1024
        $region52: #{tpu_custom_call.1} parent=47 // pred_fallthru
          _
        // Predicated region
        $region53: #{tpu_custom_call.1} parent=47 // pred_check
          %p274 = pneg %p149
        $region54: #{tpu_custom_call.1} parent=47 // pred_check_branch
          %276 = sbr.rel (%p274) target = $region56
        $region55: #{tpu_custom_call.1} parent=47 // pred_region
          %278 = dma.done [#allocation6], 1024
        $region56: #{tpu_custom_call.1} parent=47 // pred_fallthru
          _
        %p279 = scmp.lt.s32.totalorder %s23, 1
        %s280 = scalar_select %p279, %s23, 1
        %s281 = smul.addr %s280, 8
        %s282 = scalar_lea.vmem %s0, %s281
        %p283 = pneg %p44
        %p284 = pneg %p41
        %p285 = pneg %p65
        %p286 = pneg %p62
        %p287 = pneg %p86
        %p288 = pneg %p83
        %p289 = pneg %p107
        %p290 = pneg %p104
        %p291 = pneg %p128
        %p292 = pneg %p125
        %p293 = pneg %p149
        %p294 = pneg %p146
        %p295 = pneg %p170
        %p296 = pneg %p167
        %p297 = pneg %p196
        %p298 = pneg %p193
        %s299 = sand.u32 %s183, 1
        %s300 = scalar_lea.sflag [#allocation4], %s299
        %s301 = sand.u32 %s183, 1
        %s302 = smul.addr %s301, 8
        %s303 = scalar_lea.vmem [#allocation7], %s302
        %p304 = scmp.lt.s32.totalorder %s23, 1
        %s305 = scalar_select %p304, %s23, 1
        %s306 = smul.addr %s305, 8
        %s307 = scalar_lea.vmem %s0, %s306
        %v309 = vld [vmem:[%s307] sm:$0xff]
        %v310 = vpack.c.bf16 %v309, %v309
        %v311 = vld [vmem:[%s1] sm:$0x3]
        %v312 = vld [vmem:[%s2] sm:$0x1]
        %v314 = vperm.slane %v312, 0
        %vm316 = vcmask 31744
        %v318 = vsel %vm316, %v310, 0
        %vm320 = vcmask 1041408
        %v322 = vsel %vm320, %v311, 0
        %324 = vmatpush.bf16.msra.mxu0 0
        %325 = vmatpush.bf16.msra.mxu0 0
        %326 = vmatpush.bf16.msra.mxu0 0
        %327 = vmatpush.bf16.msra.mxu0 0
        %328 = vmatpush.bf16.msra.mxu0 0
        %329 = vmatpush.bf16.msra.mxu0 0
        %330 = vmatpush.bf16.msra.mxu0 0
        %331 = vmatpush.bf16.msra.mxu0 %v322
        %332 = vmatmul.bf16.gmra.mxu0 %v318
        %v333 = vpop.f32.mrf.mxu0
        %v334 = vadd.f32 %v314, %v333
        %v335 = vpop.f32.mrf.mxu0
        %336 = vdwg.mxu0
        %v337 = vtanh.pop %v334
        %v338 = vpack.c.bf16 %v337, %v337
        %v339 = vld [vmem:[#allocation2] sm:$0xf]
        %v340 = vld [vmem:[#allocation2 + $0x4] sm:$0xf]
        %v341 = vld [vmem:[#allocation2 + $0x8] sm:$0xf]
        %v342 = vld [vmem:[#allocation2 + $0xc] sm:$0xf]
        %v343 = vld [vmem:[#allocation2 + $0x10] sm:$0xf]
        %v344 = vld [vmem:[#allocation2 + $0x14] sm:$0xf]
        %v345 = vld [vmem:[#allocation2 + $0x18] sm:$0xf]
        %v346 = vld [vmem:[#allocation2 + $0x1c] sm:$0xf]
        %v347 = vld [vmem:[#allocation2 + $0x20] sm:$0xf]
        %v348 = vld [vmem:[#allocation2 + $0x24] sm:$0xf]
        %v349 = vld [vmem:[#allocation2 + $0x28] sm:$0xf]
        %v350 = vld [vmem:[#allocation2 + $0x2c] sm:$0xf]
        %v351 = vld [vmem:[#allocation2 + $0x30] sm:$0xf]
        %v352 = vld [vmem:[#allocation2 + $0x34] sm:$0xf]
        %v353 = vld [vmem:[#allocation2 + $0x38] sm:$0xf]
        %v354 = vld [vmem:[#allocation2 + $0x3c] sm:$0xf]
        %v355 = vld [vmem:[%s4] sm:$0x1]
        %v357 = vperm.slane %v355, 0
        %v375 = vunpack.c.l.b16 %v339
        %v376 = vunpack.c.l.b16 %v340
        %v377 = vunpack.c.l.b16 %v341
        %v378 = vunpack.c.l.b16 %v342
        %v379 = vunpack.c.l.b16 %v343
        %v380 = vunpack.c.l.b16 %v344
        %v381 = vunpack.c.l.b16 %v345
        %v382 = vunpack.c.l.b16 %v346
        %v383 = vunpack.c.l.b16 %v347
        %v384 = vunpack.c.l.b16 %v348
        %v385 = vunpack.c.l.b16 %v349
        %v386 = vunpack.c.l.b16 %v350
        %v387 = vunpack.c.l.b16 %v351
        %v388 = vunpack.c.l.b16 %v352
        %v389 = vunpack.c.l.b16 %v353
        %v390 = vunpack.c.l.b16 %v354
        %v391 = vpack.c.b16 %v376, %v375
        %v392 = vpack.c.b16 %v378, %v377
        %v393 = vpack.c.b16 %v380, %v379
        %v394 = vpack.c.b16 %v382, %v381
        %v395 = vpack.c.b16 %v384, %v383
        %v396 = vpack.c.b16 %v386, %v385
        %v397 = vpack.c.b16 %v388, %v387
        %v398 = vpack.c.b16 %v390, %v389
        %407 = vmatpush.bf16.msra.mxu0 %v398
        %408 = vmatpush.bf16.msra.mxu0 %v397
        %409 = vmatpush.bf16.msra.mxu0 %v396
        %410 = vmatpush.bf16.msra.mxu0 %v395
        %411 = vmatpush.bf16.msra.mxu0 %v394
        %412 = vmatpush.bf16.msra.mxu0 %v393
        %413 = vmatpush.bf16.msra.mxu0 %v392
        %414 = vmatpush.bf16.msra.mxu0 %v391
        %415 = vmatmul.bf16.gmra.mxu0 %v338
        %v416 = vpop.f32.mrf.mxu0
        %v417 = vadd.f32 %v357, %v416
        %v418 = vpop.f32.mrf.mxu0
        %419 = vdwg.mxu0
        %v420 = vtanh.pop %v417
        %v421 = vpack.c.bf16 %v420, %v420
        %v422 = vld [vmem:[#allocation5] sm:$0xf]
        %v423 = vld [vmem:[#allocation5 + $0x4] sm:$0xf]
        %v424 = vld [vmem:[#allocation5 + $0x8] sm:$0xf]
        %v425 = vld [vmem:[#allocation5 + $0xc] sm:$0xf]
        %v426 = vld [vmem:[#allocation5 + $0x10] sm:$0xf]
        %v427 = vld [vmem:[#allocation5 + $0x14] sm:$0xf]
        %v428 = vld [vmem:[#allocation5 + $0x18] sm:$0xf]
        %v429 = vld [vmem:[#allocation5 + $0x1c] sm:$0xf]
        %v430 = vld [vmem:[#allocation5 + $0x20] sm:$0xf]
        %v431 = vld [vmem:[#allocation5 + $0x24] sm:$0xf]
        %v432 = vld [vmem:[#allocation5 + $0x28] sm:$0xf]
        %v433 = vld [vmem:[#allocation5 + $0x2c] sm:$0xf]
        %v434 = vld [vmem:[#allocation5 + $0x30] sm:$0xf]
        %v435 = vld [vmem:[#allocation5 + $0x34] sm:$0xf]
        %v436 = vld [vmem:[#allocation5 + $0x38] sm:$0xf]
        %v437 = vld [vmem:[#allocation5 + $0x3c] sm:$0xf]
        %v438 = vld [vmem:[%s6] sm:$0x1]
        %v440 = vperm.slane %v438, 0
        %v458 = vunpack.c.l.b16 %v422
        %v459 = vunpack.c.l.b16 %v423
        %v460 = vunpack.c.l.b16 %v424
        %v461 = vunpack.c.l.b16 %v425
        %v462 = vunpack.c.l.b16 %v426
        %v463 = vunpack.c.l.b16 %v427
        %v464 = vunpack.c.l.b16 %v428
        %v465 = vunpack.c.l.b16 %v429
        %v466 = vunpack.c.l.b16 %v430
        %v467 = vunpack.c.l.b16 %v431
        %v468 = vunpack.c.l.b16 %v432
        %v469 = vunpack.c.l.b16 %v433
        %v470 = vunpack.c.l.b16 %v434
        %v471 = vunpack.c.l.b16 %v435
        %v472 = vunpack.c.l.b16 %v436
        %v473 = vunpack.c.l.b16 %v437
        %v474 = vpack.c.b16 %v459, %v458
        %v475 = vpack.c.b16 %v461, %v460
        %v476 = vpack.c.b16 %v463, %v462
        %v477 = vpack.c.b16 %v465, %v464
        %v478 = vpack.c.b16 %v467, %v466
        %v479 = vpack.c.b16 %v469, %v468
        %v480 = vpack.c.b16 %v471, %v470
        %v481 = vpack.c.b16 %v473, %v472
        %490 = vmatpush.bf16.msra.mxu0 %v481
        %491 = vmatpush.bf16.msra.mxu0 %v480
        %492 = vmatpush.bf16.msra.mxu0 %v479
        %493 = vmatpush.bf16.msra.mxu0 %v478
        %494 = vmatpush.bf16.msra.mxu0 %v477
        %495 = vmatpush.bf16.msra.mxu0 %v476
        %496 = vmatpush.bf16.msra.mxu0 %v475
        %497 = vmatpush.bf16.msra.mxu0 %v474
        %498 = vmatmul.bf16.gmra.mxu0 %v421
        %v499 = vpop.f32.mrf.mxu0
        %v500 = vadd.f32 %v440, %v499
        %v501 = vpop.f32.mrf.mxu0
        %502 = vdwg.mxu0
        %v503 = vlaneseq
        %v504 = vand.u32 %v503, 127
        %vm505 = vcmp.lt.s32.totalorder %v504, 4
        %vm506 = vcmp.ge.s32.totalorder %v504, 4
        %vm507 = vcmp.lt.s32.totalorder %v504, 12
        %vm508 = vmand %vm506, %vm507
        %v509 = vsel %vm505, %v500, -inf
        %510 = vmax.xlane.f32.xlu0 %v509
        %v511 = vpop.xlane.xlu0 %510
        %v512 = vsub.f32 %v500, %v511
        %v513 = vsel %vm508, %v500, 0.0
        %v514 = vsel %vm505, %v512, %v513
        %v515 = vmul.f32 %v514, 1.442695
        %v516 = vpow.pop %v515
        %v517 = vsel %vm505, %v516, 0.0
        %518 = vadd.xlane.f32.xlu0 %v517
        %v519 = vpop.xlane.xlu0 %518
        %v520 = vrcp.pop %v519
        %v521 = vmul.f32 %v519, %v520
        %v522 = vsub.f32 1.0, %v521
        %v523 = vmul.f32 %v520, %v522
        %v524 = vadd.f32 %v520, %v523
        %vm525 = vweird.f32 %v519
        %vm526 = vweird.f32 %v520
        %vm527 = vmor %vm525, %vm526
        %v528 = vsel %vm527, %v520, %v524
        %v529 = vand.u32 2147483647, %v519
        %vm530 = vcmp.eq.f32.partialorder %v529, 8.507059e+37
        %v531 = vand.u32 %v519, 2147483648
        %v532 = vor.u32 1.1754944e-38, %v531
        %v533 = vsel %vm530, %v532, %v528
        %v534 = vmul.f32 %v516, %v533
        %v535 = vsel %vm508, %v516, %v500
        %v536 = vsel %vm505, %v534, %v535
        %537 = vst [vmem:[%s303] sm:$0xff] %v536
        %s538 = sand.u32 %s183, 1
        %s539 = scalar_lea.sflag [#allocation4], %s538
        %s540 = sand.u32 %s183, 1
        %s541 = smul.addr %s540, 8
        %s542 = scalar_lea.vmem [#allocation7], %s541
        // Predicated region
        $region57: #{tpu_custom_call.1} parent=47 // pred_check
          %p543 = pneg %p193
        $region58: #{tpu_custom_call.1} parent=47 // pred_check_branch
          %545 = sbr.rel (%p543) target = $region60
        $region59: #{tpu_custom_call.1} parent=47 // pred_region
          %547 = vsyncadd %s539, 0
          %s548 = smul.addr %s23, 8
          %s549 = scalar_lea.hbm %s7, %s548
          %s551 = sshll.u32 %s542, 4
          %s552 = int_to_ptr.vmem [resolvable:$true] %s551
          %s553 = sshll.u32 %s549, 4
          %s554 = int_to_ptr.hbm [resolvable:$true] %s553
          %556 = dma.vmem_to_hbm [thread:$0]  %s552, 128, %s554, %s539
        $region60: #{tpu_custom_call.1} parent=47 // pred_fallthru
          _
      $region48: #{tpu_custom_call.1} parent=5 // pred_fallthru
        _
      %p557 = scmp.le.s32.totalorder 2, %s18
      // Predicated region
      $region61: #{tpu_custom_call.1} parent=5 // pred_check
        %p558 = pneg %p557
      $region62: #{tpu_custom_call.1} parent=5 // pred_check_branch
        %560 = sbr.rel (%p558) target = $region64
      $region63: #{tpu_custom_call.1} parent=5 // pred_region
        %s561 = ssub.s32 %s18, 2
        // Predicated region
        $region65: #{tpu_custom_call.1} parent=63 // pred_check
          %p562 = pneg %p199
        $region66: #{tpu_custom_call.1} parent=63 // pred_check_branch
          %564 = sbr.rel (%p562) target = $region68
        $region67: #{tpu_custom_call.1} parent=63 // pred_region
          %s565 = sand.u32 %s184, 1
          %s566 = scalar_lea.sflag [#allocation4], %s565
          %s567 = sand.u32 %s184, 1
          %s568 = smul.addr %s567, 8
          %s569 = scalar_lea.vmem [#allocation7], %s568
          %571 = dma.done %s566, 128
        $region68: #{tpu_custom_call.1} parent=63 // pred_fallthru
          _
      $region64: #{tpu_custom_call.1} parent=5 // pred_fallthru
        _
    $region6: #{tpu_custom_call.1} parent=1 // loop_footer
      %s22 = sadd.s32 1, %s18
    $region7: #{tpu_custom_call.1} parent=1 // loop_footer_branch
      %17 = sbr.rel target = $region3
    $region8: #{tpu_custom_call.1} parent=1 // loop_exit
      _
    %572 = vsyncpa [#allocation3], 1
    %s573 = scalar_lea.sflag [#allocation3], 1
    %574 = vsyncpa %s573, 1
    %575 = vsyncpa [#allocation6], 1
    %576 = vsyncpa [#allocation4], 1
    %s577 = scalar_lea.sflag [#allocation4], 1
    %578 = vsyncpa %s577, 1

</llo_original>
